<compile_context>
chip_gen: v5e
topology: v5e:2x2
jax: 0.10.0
libtpu: 0.0.40
codegen_flags: <defaults>
</compile_context>

<pallas_src>
import jax
import jax.numpy as jnp
from jax.experimental import pallas as pl
from jax.experimental.pallas import tpu as pltpu


_LANES = 128
_TILE_E_CAP = 32768            # sanity cap on rows per block
_MIB = 1024 * 1024


def _dot_product_decoder_kernel(x_ref, o_ref):
    # x_ref: (tile_e, 2*D) tile in VMEM; o_ref: (tile_e // 128, 128) lane-dense output.
    two_d = x_ref.shape[1]
    d = two_d // 2
    # Slice the ref halves directly (no full-tile f32 materialization).  The multiply
    # runs in the native input dtype (bf16 VALU on v6e/v7x); the product is cast to
    # float32 so the feature-axis accumulation and the sigmoid are f32.
    # NOTE: for bf16 inputs the product itself is bf16 (the PyTorch reference would
    # multiply in f32) -- acceptable under the documented test tolerance.
    a = x_ref[:, :d]
    b = x_ref[:, d:]
    prod = (a * b).astype(jnp.float32)                       # (tile_e, D) f32 temp
    g, lanes = o_ref.shape                                   # (tile_e // 128, 128)
    # Splitting the major (edge/sublane) axis into (g, 128) is a free vreg regrouping;
    # the lane-axis reduce then lands 128 edge results per output row -> unmasked,
    # lane-dense stores and a dense writeback DMA.
    y = jnp.sum(prod.reshape(g, lanes, d), axis=-1)          # (g, 128) float32
    o_ref[...] = jax.nn.sigmoid(y).astype(o_ref.dtype)       # sigmoid on the EUP


def _generation_params():
    """(vmem_limit_bytes, working-set budget bytes, min grid steps) per generation.

    v7x-class TC: 64 MiB physical VMEM but 3.2 TB/s HBM -> bigger blocks, deeper grid
    (2 TCs to feed).  v5e/v6e: 128 MiB VMEM, lower HBM BW -> 8-16 MiB blocks already
    amortize the ~0.35 us per-step overhead; keep a conservative 32 MiB limit.
    """
    vmem_cap = 128 * _MIB
    try:
        info = pltpu.get_tpu_info()
        vmem_cap = getattr(info, "vmem_capacity_bytes", vmem_cap) or vmem_cap
    except Exception:
        pass
    if vmem_cap <= 64 * _MIB:                      # v7x-class
        return 48 * _MIB, 40 * _MIB, 8
    return 32 * _MIB, 24 * _MIB, 4


def _row_cost_bytes(two_d, itemsize):
    """VMEM working-set cost per edge row: lane-padded, double-buffered input row plus
    the f32 product temporary row."""
    row_in = pl.cdiv(two_d, _LANES) * _LANES * itemsize
    row_tmp = pl.cdiv(two_d // 2, _LANES) * _LANES * 4
    return 2 * row_in + row_tmp


def _choose_tile_e(E, two_d, itemsize, work_budget, min_steps):
    """Edge-tile size: as large as the VMEM working-set budget allows, multiple of 128,
    and (for multi-block grids) a multiple of 1024 so the (tile_e//128, 128) output
    block keeps its sublane dim a multiple of 8."""
    e_pad = pl.cdiv(E, _LANES) * _LANES
    row_cost = _row_cost_bytes(two_d, itemsize)
    budget_rows = max(work_budget // row_cost, _LANES)

    if e_pad <= 1024:
        return e_pad                                # tiny problem: one block is fine

    # Target at least `min_steps` grid steps for DMA/compute overlap (and dual-TC
    # sharding on v7x), subject to the VMEM budget.
    per_step = pl.cdiv(e_pad, min_steps)
    tile = min(int(budget_rows), int(per_step), _TILE_E_CAP)
    return max(1024, (tile // 1024) * 1024)


def dot_product_decoder(edge_embeddings, *, tile_e=None):
    """edge_embeddings: (E, 2*D). Returns (E,) = sigmoid(sum(a * b, axis=1))."""
    E, two_d = edge_embeddings.shape
    if two_d % 2 != 0:
        raise ValueError("feature dim must be even (concat of two embeddings)")
    dtype = edge_embeddings.dtype
    itemsize = jnp.dtype(dtype).itemsize

    vmem_limit, work_budget, min_steps = _generation_params()
    if tile_e is None:
        tile_e = _choose_tile_e(E, two_d, itemsize, work_budget, min_steps)
    if tile_e % _LANES != 0:
        raise ValueError("tile_e must be a multiple of 128")

    # Very wide rows can push the minimum legal multi-block tile (1024 rows) past the
    # budget; bump the limit (with headroom) instead of failing at compile time.
    # TODO(synk): for extremely wide embeddings, split the feature dim onto a second
    # ("arbitrary") grid axis with an f32 accumulator instead of growing VMEM.
    needed = tile_e * _row_cost_bytes(two_d, itemsize) + 4 * _MIB
    vmem_limit = int(max(vmem_limit, needed))

    e_blocks = pl.cdiv(E, _LANES)                  # rows of the lane-dense output
    g = tile_e // _LANES
    grid = (pl.cdiv(E, tile_e),)                   # boundary blocks masked by Pallas

    out = pl.pallas_call(
        _dot_product_decoder_kernel,
        out_shape=jax.ShapeDtypeStruct((e_blocks, _LANES), dtype),
        grid=grid,
        in_specs=[pl.BlockSpec((tile_e, two_d), lambda i: (i, 0))],
        out_specs=pl.BlockSpec((g, _LANES), lambda i: (i, 0)),
        compiler_params=pltpu.CompilerParams(
            dimension_semantics=("parallel",),
            vmem_limit_bytes=vmem_limit,
        ),
    )(edge_embeddings)

    # (e_blocks, 128) -> (E,): contiguous reshape + trim of the padded tail lanes.
    return out.reshape(-1)[:E]


def _reference(edge_embeddings):
    d = edge_embeddings.shape[1] // 2
    a = edge_embeddings[:, :d].astype(jnp.float32)
    b = edge_embeddings[:, d:].astype(jnp.float32)
    y = jax.nn.sigmoid(jnp.sum(a * b, axis=1))
    return y.astype(edge_embeddings.dtype)


if __name__ == "__main__":
    key = jax.random.PRNGKey(0)
    k1, k2 = jax.random.split(key)

    # Case 1: float32, E divisible by 128.  512 edges, node dim 32 -> concat width 64.
    E, D = 512, 32
    x = jax.random.normal(k1, (E, 2 * D), dtype=jnp.float32)
    out = jax.block_until_ready(dot_product_decoder(x))
    ref = _reference(x)
    assert out.shape == (E,)
    assert jnp.allclose(out, ref, atol=1e-5, rtol=1e-5), "f32 mismatch vs reference"

    # Case 2: bfloat16 input and a non-divisible E (tail masking).  The kernel
    # multiplies in bf16 and accumulates in f32, so tolerance is looser than f32.
    E2 = 200
    x2 = jax.random.normal(k2, (E2, 2 * D), dtype=jnp.float32).astype(jnp.bfloat16)
    out2 = jax.block_until_ready(dot_product_decoder(x2))
    ref2 = _reference(x2)
    assert out2.shape == (E2,)
    assert jnp.allclose(out2.astype(jnp.float32), ref2.astype(jnp.float32),
                        atol=2e-2, rtol=2e-2), "bf16 mismatch vs reference"

    # Case 3: exercise the multi-block path (grid > 1, boundary masking) at modest size.
    E3 = 5000
    x3 = jax.random.normal(k1, (E3, 2 * D), dtype=jnp.float32)
    out3 = jax.block_until_ready(dot_product_decoder(x3, tile_e=1024))
    ref3 = _reference(x3)
    assert out3.shape == (E3,)
    assert jnp.allclose(out3, ref3, atol=1e-5, rtol=1e-5), "multi-block mismatch vs reference"

    print("KERNEL_OK")
</pallas_src>

<mosaic_0001>
module attributes {stable_mosaic.version = 11 : i64} {
  func.func @_dot_product_decoder_kernel(%arg0: i32, %arg1: memref<512x64xf32, #tpu.memory_space<vmem>>, %arg2: memref<4x128xf32, #tpu.memory_space<vmem>>) attributes {dimension_semantics = [#tpu.dimension_semantics<parallel>], iteration_bounds = array<i64: 1>, scalar_prefetch = 0 : i64, scratch_operands = 0 : i64, tpu.core_type = #tpu.core_type<tc>, window_params = [{transform_indices = @transform_0, window_bounds = array<i64: 512, 64>}, {transform_indices = @transform_1, window_bounds = array<i64: 4, 128>}]} {
    %c0 = arith.constant 0 : index
    %c0_0 = arith.constant 0 : index
    %0 = vector.load %arg1[%c0, %c0_0] : memref<512x64xf32, #tpu.memory_space<vmem>>, vector<512x32xf32>
    %c0_1 = arith.constant 0 : index
    %c32 = arith.constant 32 : index
    %1 = vector.load %arg1[%c0_1, %c32] : memref<512x64xf32, #tpu.memory_space<vmem>>, vector<512x32xf32>
    %2 = arith.mulf %0, %1 : vector<512x32xf32>
    %3 = vector.shape_cast %2 : vector<512x32xf32> to vector<4x128x32xf32>
    %cst = arith.constant dense<0.000000e+00> : vector<4x128xf32>
    %4 = vector.multi_reduction <add>, %3, %cst [2] : vector<4x128x32xf32> to vector<4x128xf32>
    %5 = arith.negf %4 : vector<4x128xf32>
    %6 = math.exp %5 : vector<4x128xf32>
    %cst_2 = arith.constant 1.000000e+00 : f32
    %7 = vector.broadcast %cst_2 : f32 to vector<4x128xf32>
    %8 = arith.addf %7, %6 : vector<4x128xf32>
    %9 = arith.divf %7, %8 : vector<4x128xf32>
    %c0_3 = arith.constant 0 : index
    %c0_4 = arith.constant 0 : index
    %10 = vector.load %arg2[%c0_3, %c0_4] : memref<4x128xf32, #tpu.memory_space<vmem>>, vector<4x128xf32>
    tpu.vector_store %arg2[%c0_3, %c0_4], %9 {strides = array<i32>} : memref<4x128xf32, #tpu.memory_space<vmem>>, vector<4x128xf32>,
    return
  }
  func.func @transform_0(%arg0: i32) -> (i32, i32) {
    %c0_i32 = arith.constant 0 : i32
    %c0_i32_0 = arith.constant 0 : i32
    return %arg0, %c0_i32 : i32, i32
  }
  func.func @transform_1(%arg0: i32) -> (i32, i32) {
    %c0_i32 = arith.constant 0 : i32
    %c0_i32_0 = arith.constant 0 : i32
    return %arg0, %c0_i32 : i32, i32
  }
}

</mosaic_0001>

<llo_original>
// kernel: tpu_custom_call.1
$region0: #{tpu_custom_call.1}
  #allocation0 [shape = 'u32[]', space=smem, size = 0x4, offset = 0x4, fixed_abs, tag = 'smem constant byte address 0x4 - core index']
  #allocation1 [shape = 'u32[72,128]{1,0:T(1,128)}', space=vmem, size = 0x9000, scoped, tag = 'internal scratch']
  %s0 = inlined_call_operand.vmem [shape: f32[512,64], index: 0, kind: input, shape index: {}]
  %s1 = inlined_call_operand.hbm [shape: f32[4,128], index: 1, kind: output, shape index: {}]
  %s2 = sld [smem:[#allocation0]]
  $region14: #{tpu_custom_call.1} parent=0
    _
  %s4 = ssub.s32 1, %s2
  %s5 = scalar_select 0, %s4, %s2
  $region1: #{tpu_custom_call.1} parent=0
    #allocation2 [shape = 'u8[2048]{0}', space=vmem, size = 0x800, scoped, tag = 'output window, operand 0, single buffered']
    #allocation3 [shape = 's32[1]{0}', space=sflag, size = 0x4, scoped, tag = 'scoped memory for tpu_custom_call.1']
    %6 = vsyncpa [#allocation3], 0
    // Predicated region
    $region2: #{tpu_custom_call.1} parent=1 // pred_check
      _
    $region3: #{tpu_custom_call.1} parent=1 // pred_check_branch
      %8 = sbr.rel (0) target = $region5
    $region4: #{tpu_custom_call.1} parent=1 // pred_region
      _
    $region5: #{tpu_custom_call.1} parent=1 // pred_fallthru
      _
    %v9 = vld [vmem:[%s0] sm:$0xff]
    %v10 = vld [vmem:[%s0 + $0x8] sm:$0xff]
    %v11 = vld [vmem:[%s0 + $0x10] sm:$0xff]
    %v12 = vld [vmem:[%s0 + $0x18] sm:$0xff]
    %v13 = vld [vmem:[%s0 + $0x20] sm:$0xff]
    %v14 = vld [vmem:[%s0 + $0x28] sm:$0xff]
    %v15 = vld [vmem:[%s0 + $0x30] sm:$0xff]
    %v16 = vld [vmem:[%s0 + $0x38] sm:$0xff]
    %v17 = vld [vmem:[%s0 + $0x40] sm:$0xff]
    %v18 = vld [vmem:[%s0 + $0x48] sm:$0xff]
    %v19 = vld [vmem:[%s0 + $0x50] sm:$0xff]
    %v20 = vld [vmem:[%s0 + $0x58] sm:$0xff]
    %v21 = vld [vmem:[%s0 + $0x60] sm:$0xff]
    %v22 = vld [vmem:[%s0 + $0x68] sm:$0xff]
    %v23 = vld [vmem:[%s0 + $0x70] sm:$0xff]
    %v24 = vld [vmem:[%s0 + $0x78] sm:$0xff]
    %v25 = vld [vmem:[%s0 + $0x80] sm:$0xff]
    %v26 = vld [vmem:[%s0 + $0x88] sm:$0xff]
    %v27 = vld [vmem:[%s0 + $0x90] sm:$0xff]
    %v28 = vld [vmem:[%s0 + $0x98] sm:$0xff]
    %v29 = vld [vmem:[%s0 + $0xa0] sm:$0xff]
    %v30 = vld [vmem:[%s0 + $0xa8] sm:$0xff]
    %v31 = vld [vmem:[%s0 + $0xb0] sm:$0xff]
    %v32 = vld [vmem:[%s0 + $0xb8] sm:$0xff]
    %v33 = vld [vmem:[%s0 + $0xc0] sm:$0xff]
    %v34 = vld [vmem:[%s0 + $0xc8] sm:$0xff]
    %v35 = vld [vmem:[%s0 + $0xd0] sm:$0xff]
    %v36 = vld [vmem:[%s0 + $0xd8] sm:$0xff]
    %v37 = vld [vmem:[%s0 + $0xe0] sm:$0xff]
    %v38 = vld [vmem:[%s0 + $0xe8] sm:$0xff]
    %v39 = vld [vmem:[%s0 + $0xf0] sm:$0xff]
    %v40 = vld [vmem:[%s0 + $0xf8] sm:$0xff]
    %v41 = vld [vmem:[%s0 + $0x100] sm:$0xff]
    %v42 = vld [vmem:[%s0 + $0x108] sm:$0xff]
    %v43 = vld [vmem:[%s0 + $0x110] sm:$0xff]
    %v44 = vld [vmem:[%s0 + $0x118] sm:$0xff]
    %v45 = vld [vmem:[%s0 + $0x120] sm:$0xff]
    %v46 = vld [vmem:[%s0 + $0x128] sm:$0xff]
    %v47 = vld [vmem:[%s0 + $0x130] sm:$0xff]
    %v48 = vld [vmem:[%s0 + $0x138] sm:$0xff]
    %v49 = vld [vmem:[%s0 + $0x140] sm:$0xff]
    %v50 = vld [vmem:[%s0 + $0x148] sm:$0xff]
    %v51 = vld [vmem:[%s0 + $0x150] sm:$0xff]
    %v52 = vld [vmem:[%s0 + $0x158] sm:$0xff]
    %v53 = vld [vmem:[%s0 + $0x160] sm:$0xff]
    %v54 = vld [vmem:[%s0 + $0x168] sm:$0xff]
    %v55 = vld [vmem:[%s0 + $0x170] sm:$0xff]
    %v56 = vld [vmem:[%s0 + $0x178] sm:$0xff]
    %v57 = vld [vmem:[%s0 + $0x180] sm:$0xff]
    %v58 = vld [vmem:[%s0 + $0x188] sm:$0xff]
    %v59 = vld [vmem:[%s0 + $0x190] sm:$0xff]
    %v60 = vld [vmem:[%s0 + $0x198] sm:$0xff]
    %v61 = vld [vmem:[%s0 + $0x1a0] sm:$0xff]
    %v62 = vld [vmem:[%s0 + $0x1a8] sm:$0xff]
    %v63 = vld [vmem:[%s0 + $0x1b0] sm:$0xff]
    %v64 = vld [vmem:[%s0 + $0x1b8] sm:$0xff]
    %v65 = vld [vmem:[%s0 + $0x1c0] sm:$0xff]
    %v66 = vld [vmem:[%s0 + $0x1c8] sm:$0xff]
    %v67 = vld [vmem:[%s0 + $0x1d0] sm:$0xff]
    %v68 = vld [vmem:[%s0 + $0x1d8] sm:$0xff]
    %v69 = vld [vmem:[%s0 + $0x1e0] sm:$0xff]
    %v70 = vld [vmem:[%s0 + $0x1e8] sm:$0xff]
    %v71 = vld [vmem:[%s0 + $0x1f0] sm:$0xff]
    %v72 = vld [vmem:[%s0 + $0x1f8] sm:$0xff]
    %137 = vrot.lane.b32.xlu0 %v9, 96
    %v138 = vpop.permute.xlu0 %137
    %139 = vrot.lane.b32.xlu0 %v10, 96
    %v140 = vpop.permute.xlu0 %139
    %141 = vrot.lane.b32.xlu0 %v11, 96
    %v142 = vpop.permute.xlu0 %141
    %143 = vrot.lane.b32.xlu0 %v12, 96
    %v144 = vpop.permute.xlu0 %143
    %145 = vrot.lane.b32.xlu0 %v13, 96
    %v146 = vpop.permute.xlu0 %145
    %147 = vrot.lane.b32.xlu0 %v14, 96
    %v148 = vpop.permute.xlu0 %147
    %149 = vrot.lane.b32.xlu0 %v15, 96
    %v150 = vpop.permute.xlu0 %149
    %151 = vrot.lane.b32.xlu0 %v16, 96
    %v152 = vpop.permute.xlu0 %151
    %153 = vrot.lane.b32.xlu0 %v17, 96
    %v154 = vpop.permute.xlu0 %153
    %155 = vrot.lane.b32.xlu0 %v18, 96
    %v156 = vpop.permute.xlu0 %155
    %157 = vrot.lane.b32.xlu0 %v19, 96
    %v158 = vpop.permute.xlu0 %157
    %159 = vrot.lane.b32.xlu0 %v20, 96
    %v160 = vpop.permute.xlu0 %159
    %161 = vrot.lane.b32.xlu0 %v21, 96
    %v162 = vpop.permute.xlu0 %161
    %163 = vrot.lane.b32.xlu0 %v22, 96
    %v164 = vpop.permute.xlu0 %163
    %165 = vrot.lane.b32.xlu0 %v23, 96
    %v166 = vpop.permute.xlu0 %165
    %167 = vrot.lane.b32.xlu0 %v24, 96
    %v168 = vpop.permute.xlu0 %167
    %169 = vrot.lane.b32.xlu0 %v25, 96
    %v170 = vpop.permute.xlu0 %169
    %171 = vrot.lane.b32.xlu0 %v26, 96
    %v172 = vpop.permute.xlu0 %171
    %173 = vrot.lane.b32.xlu0 %v27, 96
    %v174 = vpop.permute.xlu0 %173
    %175 = vrot.lane.b32.xlu0 %v28, 96
    %v176 = vpop.permute.xlu0 %175
    %177 = vrot.lane.b32.xlu0 %v29, 96
    %v178 = vpop.permute.xlu0 %177
    %179 = vrot.lane.b32.xlu0 %v30, 96
    %v180 = vpop.permute.xlu0 %179
    %181 = vrot.lane.b32.xlu0 %v31, 96
    %v182 = vpop.permute.xlu0 %181
    %183 = vrot.lane.b32.xlu0 %v32, 96
    %v184 = vpop.permute.xlu0 %183
    %185 = vrot.lane.b32.xlu0 %v33, 96
    %v186 = vpop.permute.xlu0 %185
    %187 = vrot.lane.b32.xlu0 %v34, 96
    %v188 = vpop.permute.xlu0 %187
    %189 = vrot.lane.b32.xlu0 %v35, 96
    %v190 = vpop.permute.xlu0 %189
    %191 = vrot.lane.b32.xlu0 %v36, 96
    %v192 = vpop.permute.xlu0 %191
    %193 = vrot.lane.b32.xlu0 %v37, 96
    %v194 = vpop.permute.xlu0 %193
    %195 = vrot.lane.b32.xlu0 %v38, 96
    %v196 = vpop.permute.xlu0 %195
    %197 = vrot.lane.b32.xlu0 %v39, 96
    %v198 = vpop.permute.xlu0 %197
    %199 = vrot.lane.b32.xlu0 %v40, 96
    %v200 = vpop.permute.xlu0 %199
    %201 = vrot.lane.b32.xlu0 %v41, 96
    %v202 = vpop.permute.xlu0 %201
    %203 = vrot.lane.b32.xlu0 %v42, 96
    %v204 = vpop.permute.xlu0 %203
    %205 = vrot.lane.b32.xlu0 %v43, 96
    %v206 = vpop.permute.xlu0 %205
    %207 = vrot.lane.b32.xlu0 %v44, 96
    %v208 = vpop.permute.xlu0 %207
    %209 = vrot.lane.b32.xlu0 %v45, 96
    %v210 = vpop.permute.xlu0 %209
    %211 = vrot.lane.b32.xlu0 %v46, 96
    %v212 = vpop.permute.xlu0 %211
    %213 = vrot.lane.b32.xlu0 %v47, 96
    %v214 = vpop.permute.xlu0 %213
    %215 = vrot.lane.b32.xlu0 %v48, 96
    %v216 = vpop.permute.xlu0 %215
    %217 = vrot.lane.b32.xlu0 %v49, 96
    %v218 = vpop.permute.xlu0 %217
    %219 = vrot.lane.b32.xlu0 %v50, 96
    %v220 = vpop.permute.xlu0 %219
    %221 = vrot.lane.b32.xlu0 %v51, 96
    %v222 = vpop.permute.xlu0 %221
    %223 = vrot.lane.b32.xlu0 %v52, 96
    %v224 = vpop.permute.xlu0 %223
    %225 = vrot.lane.b32.xlu0 %v53, 96
    %v226 = vpop.permute.xlu0 %225
    %227 = vrot.lane.b32.xlu0 %v54, 96
    %v228 = vpop.permute.xlu0 %227
    %229 = vrot.lane.b32.xlu0 %v55, 96
    %v230 = vpop.permute.xlu0 %229
    %231 = vrot.lane.b32.xlu0 %v56, 96
    %v232 = vpop.permute.xlu0 %231
    %233 = vrot.lane.b32.xlu0 %v57, 96
    %v234 = vpop.permute.xlu0 %233
    %235 = vrot.lane.b32.xlu0 %v58, 96
    %v236 = vpop.permute.xlu0 %235
    %237 = vrot.lane.b32.xlu0 %v59, 96
    %v238 = vpop.permute.xlu0 %237
    %239 = vrot.lane.b32.xlu0 %v60, 96
    %v240 = vpop.permute.xlu0 %239
    %241 = vrot.lane.b32.xlu0 %v61, 96
    %v242 = vpop.permute.xlu0 %241
    %243 = vrot.lane.b32.xlu0 %v62, 96
    %v244 = vpop.permute.xlu0 %243
    %245 = vrot.lane.b32.xlu0 %v63, 96
    %v246 = vpop.permute.xlu0 %245
    %247 = vrot.lane.b32.xlu0 %v64, 96
    %v248 = vpop.permute.xlu0 %247
    %249 = vrot.lane.b32.xlu0 %v65, 96
    %v250 = vpop.permute.xlu0 %249
    %251 = vrot.lane.b32.xlu0 %v66, 96
    %v252 = vpop.permute.xlu0 %251
    %253 = vrot.lane.b32.xlu0 %v67, 96
    %v254 = vpop.permute.xlu0 %253
    %255 = vrot.lane.b32.xlu0 %v68, 96
    %v256 = vpop.permute.xlu0 %255
    %257 = vrot.lane.b32.xlu0 %v69, 96
    %v258 = vpop.permute.xlu0 %257
    %259 = vrot.lane.b32.xlu0 %v70, 96
    %v260 = vpop.permute.xlu0 %259
    %261 = vrot.lane.b32.xlu0 %v71, 96
    %v262 = vpop.permute.xlu0 %261
    %263 = vrot.lane.b32.xlu0 %v72, 96
    %v264 = vpop.permute.xlu0 %263
    %v329 = vmul.f32 %v9, %v138
    %v330 = vmul.f32 %v10, %v140
    %v331 = vmul.f32 %v11, %v142
    %v332 = vmul.f32 %v12, %v144
    %v333 = vmul.f32 %v13, %v146
    %v334 = vmul.f32 %v14, %v148
    %v335 = vmul.f32 %v15, %v150
    %v336 = vmul.f32 %v16, %v152
    %v337 = vmul.f32 %v17, %v154
    %v338 = vmul.f32 %v18, %v156
    %v339 = vmul.f32 %v19, %v158
    %v340 = vmul.f32 %v20, %v160
    %v341 = vmul.f32 %v21, %v162
    %v342 = vmul.f32 %v22, %v164
    %v343 = vmul.f32 %v23, %v166
    %v344 = vmul.f32 %v24, %v168
    %v345 = vmul.f32 %v25, %v170
    %v346 = vmul.f32 %v26, %v172
    %v347 = vmul.f32 %v27, %v174
    %v348 = vmul.f32 %v28, %v176
    %v349 = vmul.f32 %v29, %v178
    %v350 = vmul.f32 %v30, %v180
    %v351 = vmul.f32 %v31, %v182
    %v352 = vmul.f32 %v32, %v184
    %v353 = vmul.f32 %v33, %v186
    %v354 = vmul.f32 %v34, %v188
    %v355 = vmul.f32 %v35, %v190
    %v356 = vmul.f32 %v36, %v192
    %v357 = vmul.f32 %v37, %v194
    %v358 = vmul.f32 %v38, %v196
    %v359 = vmul.f32 %v39, %v198
    %v360 = vmul.f32 %v40, %v200
    %v361 = vmul.f32 %v41, %v202
    %v362 = vmul.f32 %v42, %v204
    %v363 = vmul.f32 %v43, %v206
    %v364 = vmul.f32 %v44, %v208
    %v365 = vmul.f32 %v45, %v210
    %v366 = vmul.f32 %v46, %v212
    %v367 = vmul.f32 %v47, %v214
    %v368 = vmul.f32 %v48, %v216
    %v369 = vmul.f32 %v49, %v218
    %v370 = vmul.f32 %v50, %v220
    %v371 = vmul.f32 %v51, %v222
    %v372 = vmul.f32 %v52, %v224
    %v373 = vmul.f32 %v53, %v226
    %v374 = vmul.f32 %v54, %v228
    %v375 = vmul.f32 %v55, %v230
    %v376 = vmul.f32 %v56, %v232
    %v377 = vmul.f32 %v57, %v234
    %v378 = vmul.f32 %v58, %v236
    %v379 = vmul.f32 %v59, %v238
    %v380 = vmul.f32 %v60, %v240
    %v381 = vmul.f32 %v61, %v242
    %v382 = vmul.f32 %v62, %v244
    %v383 = vmul.f32 %v63, %v246
    %v384 = vmul.f32 %v64, %v248
    %v385 = vmul.f32 %v65, %v250
    %v386 = vmul.f32 %v66, %v252
    %v387 = vmul.f32 %v67, %v254
    %v388 = vmul.f32 %v68, %v256
    %v389 = vmul.f32 %v69, %v258
    %v390 = vmul.f32 %v70, %v260
    %v391 = vmul.f32 %v71, %v262
    %v392 = vmul.f32 %v72, %v264
    %vm393 = vcmask 261120
    %v394 = vsel %vm393, %v329, 0.0
    %395 = vadd.xlane.f32.xlu0 %v394
    %v396 = vpop.xlane.xlu0 %395
    %v397 = vsel %vm393, %v330, 0.0
    %398 = vadd.xlane.f32.xlu0 %v397
    %v399 = vpop.xlane.xlu0 %398
    %v400 = vsel %vm393, %v331, 0.0
    %401 = vadd.xlane.f32.xlu0 %v400
    %v402 = vpop.xlane.xlu0 %401
    %v403 = vsel %vm393, %v332, 0.0
    %404 = vadd.xlane.f32.xlu0 %v403
    %v405 = vpop.xlane.xlu0 %404
    %v406 = vsel %vm393, %v333, 0.0
    %407 = vadd.xlane.f32.xlu0 %v406
    %v408 = vpop.xlane.xlu0 %407
    %v409 = vsel %vm393, %v334, 0.0
    %410 = vadd.xlane.f32.xlu0 %v409
    %v411 = vpop.xlane.xlu0 %410
    %v412 = vsel %vm393, %v335, 0.0
    %413 = vadd.xlane.f32.xlu0 %v412
    %v414 = vpop.xlane.xlu0 %413
    %v415 = vsel %vm393, %v336, 0.0
    %416 = vadd.xlane.f32.xlu0 %v415
    %v417 = vpop.xlane.xlu0 %416
    %v418 = vsel %vm393, %v337, 0.0
    %419 = vadd.xlane.f32.xlu0 %v418
    %v420 = vpop.xlane.xlu0 %419
    %v421 = vsel %vm393, %v338, 0.0
    %422 = vadd.xlane.f32.xlu0 %v421
    %v423 = vpop.xlane.xlu0 %422
    %v424 = vsel %vm393, %v339, 0.0
    %425 = vadd.xlane.f32.xlu0 %v424
    %v426 = vpop.xlane.xlu0 %425
    %v427 = vsel %vm393, %v340, 0.0
    %428 = vadd.xlane.f32.xlu0 %v427
    %v429 = vpop.xlane.xlu0 %428
    %v430 = vsel %vm393, %v341, 0.0
    %431 = vadd.xlane.f32.xlu0 %v430
    %v432 = vpop.xlane.xlu0 %431
    %v433 = vsel %vm393, %v342, 0.0
    %434 = vadd.xlane.f32.xlu0 %v433
    %v435 = vpop.xlane.xlu0 %434
    %v436 = vsel %vm393, %v343, 0.0
    %437 = vadd.xlane.f32.xlu0 %v436
    %v438 = vpop.xlane.xlu0 %437
    %v439 = vsel %vm393, %v344, 0.0
    %440 = vadd.xlane.f32.xlu0 %v439
    %v441 = vpop.xlane.xlu0 %440
    %v442 = vsel %vm393, %v345, 0.0
    %443 = vadd.xlane.f32.xlu0 %v442
    %v444 = vpop.xlane.xlu0 %443
    %v445 = vsel %vm393, %v346, 0.0
    %446 = vadd.xlane.f32.xlu0 %v445
    %v447 = vpop.xlane.xlu0 %446
    %v448 = vsel %vm393, %v347, 0.0
    %449 = vadd.xlane.f32.xlu0 %v448
    %v450 = vpop.xlane.xlu0 %449
    %v451 = vsel %vm393, %v348, 0.0
    %452 = vadd.xlane.f32.xlu0 %v451
    %v453 = vpop.xlane.xlu0 %452
    %v454 = vsel %vm393, %v349, 0.0
    %455 = vadd.xlane.f32.xlu0 %v454
    %v456 = vpop.xlane.xlu0 %455
    %v457 = vsel %vm393, %v350, 0.0
    %458 = vadd.xlane.f32.xlu0 %v457
    %v459 = vpop.xlane.xlu0 %458
    %v460 = vsel %vm393, %v351, 0.0
    %461 = vadd.xlane.f32.xlu0 %v460
    %v462 = vpop.xlane.xlu0 %461
    %v463 = vsel %vm393, %v352, 0.0
    %464 = vadd.xlane.f32.xlu0 %v463
    %v465 = vpop.xlane.xlu0 %464
    %v466 = vsel %vm393, %v353, 0.0
    %467 = vadd.xlane.f32.xlu0 %v466
    %v468 = vpop.xlane.xlu0 %467
    %v469 = vsel %vm393, %v354, 0.0
    %470 = vadd.xlane.f32.xlu0 %v469
    %v471 = vpop.xlane.xlu0 %470
    %v472 = vsel %vm393, %v355, 0.0
    %473 = vadd.xlane.f32.xlu0 %v472
    %v474 = vpop.xlane.xlu0 %473
    %v475 = vsel %vm393, %v356, 0.0
    %476 = vadd.xlane.f32.xlu0 %v475
    %v477 = vpop.xlane.xlu0 %476
    %v478 = vsel %vm393, %v357, 0.0
    %479 = vadd.xlane.f32.xlu0 %v478
    %v480 = vpop.xlane.xlu0 %479
    %v481 = vsel %vm393, %v358, 0.0
    %482 = vadd.xlane.f32.xlu0 %v481
    %v483 = vpop.xlane.xlu0 %482
    %v484 = vsel %vm393, %v359, 0.0
    %485 = vadd.xlane.f32.xlu0 %v484
    %v486 = vpop.xlane.xlu0 %485
    %v487 = vsel %vm393, %v360, 0.0
    %488 = vadd.xlane.f32.xlu0 %v487
    %v489 = vpop.xlane.xlu0 %488
    %v490 = vsel %vm393, %v361, 0.0
    %491 = vadd.xlane.f32.xlu0 %v490
    %v492 = vpop.xlane.xlu0 %491
    %v493 = vsel %vm393, %v362, 0.0
    %494 = vadd.xlane.f32.xlu0 %v493
    %v495 = vpop.xlane.xlu0 %494
    %v496 = vsel %vm393, %v363, 0.0
    %497 = vadd.xlane.f32.xlu0 %v496
    %v498 = vpop.xlane.xlu0 %497
    %v499 = vsel %vm393, %v364, 0.0
    %500 = vadd.xlane.f32.xlu0 %v499
    %v501 = vpop.xlane.xlu0 %500
    %v502 = vsel %vm393, %v365, 0.0
    %503 = vadd.xlane.f32.xlu0 %v502
    %v504 = vpop.xlane.xlu0 %503
    %v505 = vsel %vm393, %v366, 0.0
    %506 = vadd.xlane.f32.xlu0 %v505
    %v507 = vpop.xlane.xlu0 %506
    %v508 = vsel %vm393, %v367, 0.0
    %509 = vadd.xlane.f32.xlu0 %v508
    %v510 = vpop.xlane.xlu0 %509
    %v511 = vsel %vm393, %v368, 0.0
    %512 = vadd.xlane.f32.xlu0 %v511
    %v513 = vpop.xlane.xlu0 %512
    %v514 = vsel %vm393, %v369, 0.0
    %515 = vadd.xlane.f32.xlu0 %v514
    %v516 = vpop.xlane.xlu0 %515
    %v517 = vsel %vm393, %v370, 0.0
    %518 = vadd.xlane.f32.xlu0 %v517
    %v519 = vpop.xlane.xlu0 %518
    %v520 = vsel %vm393, %v371, 0.0
    %521 = vadd.xlane.f32.xlu0 %v520
    %v522 = vpop.xlane.xlu0 %521
    %v523 = vsel %vm393, %v372, 0.0
    %524 = vadd.xlane.f32.xlu0 %v523
    %v525 = vpop.xlane.xlu0 %524
    %v526 = vsel %vm393, %v373, 0.0
    %527 = vadd.xlane.f32.xlu0 %v526
    %v528 = vpop.xlane.xlu0 %527
    %v529 = vsel %vm393, %v374, 0.0
    %530 = vadd.xlane.f32.xlu0 %v529
    %v531 = vpop.xlane.xlu0 %530
    %v532 = vsel %vm393, %v375, 0.0
    %533 = vadd.xlane.f32.xlu0 %v532
    %v534 = vpop.xlane.xlu0 %533
    %v535 = vsel %vm393, %v376, 0.0
    %536 = vadd.xlane.f32.xlu0 %v535
    %v537 = vpop.xlane.xlu0 %536
    %v538 = vsel %vm393, %v377, 0.0
    %539 = vadd.xlane.f32.xlu0 %v538
    %v540 = vpop.xlane.xlu0 %539
    %v541 = vsel %vm393, %v378, 0.0
    %542 = vadd.xlane.f32.xlu0 %v541
    %v543 = vpop.xlane.xlu0 %542
    %v544 = vsel %vm393, %v379, 0.0
    %545 = vadd.xlane.f32.xlu0 %v544
    %v546 = vpop.xlane.xlu0 %545
    %v547 = vsel %vm393, %v380, 0.0
    %548 = vadd.xlane.f32.xlu0 %v547
    %v549 = vpop.xlane.xlu0 %548
    %v550 = vsel %vm393, %v381, 0.0
    %551 = vadd.xlane.f32.xlu0 %v550
    %v552 = vpop.xlane.xlu0 %551
    %v553 = vsel %vm393, %v382, 0.0
    %554 = vadd.xlane.f32.xlu0 %v553
    %v555 = vpop.xlane.xlu0 %554
    %v556 = vsel %vm393, %v383, 0.0
    %557 = vadd.xlane.f32.xlu0 %v556
    %v558 = vpop.xlane.xlu0 %557
    %v559 = vsel %vm393, %v384, 0.0
    %560 = vadd.xlane.f32.xlu0 %v559
    %v561 = vpop.xlane.xlu0 %560
    %v562 = vsel %vm393, %v385, 0.0
    %563 = vadd.xlane.f32.xlu0 %v562
    %v564 = vpop.xlane.xlu0 %563
    %v565 = vsel %vm393, %v386, 0.0
    %566 = vadd.xlane.f32.xlu0 %v565
    %v567 = vpop.xlane.xlu0 %566
    %v568 = vsel %vm393, %v387, 0.0
    %569 = vadd.xlane.f32.xlu0 %v568
    %v570 = vpop.xlane.xlu0 %569
    %v571 = vsel %vm393, %v388, 0.0
    %572 = vadd.xlane.f32.xlu0 %v571
    %v573 = vpop.xlane.xlu0 %572
    %v574 = vsel %vm393, %v389, 0.0
    %575 = vadd.xlane.f32.xlu0 %v574
    %v576 = vpop.xlane.xlu0 %575
    %v577 = vsel %vm393, %v390, 0.0
    %578 = vadd.xlane.f32.xlu0 %v577
    %v579 = vpop.xlane.xlu0 %578
    %v580 = vsel %vm393, %v391, 0.0
    %581 = vadd.xlane.f32.xlu0 %v580
    %v582 = vpop.xlane.xlu0 %581
    %v583 = vsel %vm393, %v392, 0.0
    %584 = vadd.xlane.f32.xlu0 %v583
    %v585 = vpop.xlane.xlu0 %584
    %v586 = vxor.u32 %v396, 2147483648
    %v587 = vxor.u32 %v399, 2147483648
    %v588 = vxor.u32 %v402, 2147483648
    %v589 = vxor.u32 %v405, 2147483648
    %v590 = vxor.u32 %v408, 2147483648
    %v591 = vxor.u32 %v411, 2147483648
    %v592 = vxor.u32 %v414, 2147483648
    %v593 = vxor.u32 %v417, 2147483648
    %v594 = vxor.u32 %v420, 2147483648
    %v595 = vxor.u32 %v423, 2147483648
    %v596 = vxor.u32 %v426, 2147483648
    %v597 = vxor.u32 %v429, 2147483648
    %v598 = vxor.u32 %v432, 2147483648
    %v599 = vxor.u32 %v435, 2147483648
    %v600 = vxor.u32 %v438, 2147483648
    %v601 = vxor.u32 %v441, 2147483648
    %v602 = vxor.u32 %v444, 2147483648
    %v603 = vxor.u32 %v447, 2147483648
    %v604 = vxor.u32 %v450, 2147483648
    %v605 = vxor.u32 %v453, 2147483648
    %v606 = vxor.u32 %v456, 2147483648
    %v607 = vxor.u32 %v459, 2147483648
    %v608 = vxor.u32 %v462, 2147483648
    %v609 = vxor.u32 %v465, 2147483648
    %v610 = vxor.u32 %v468, 2147483648
    %v611 = vxor.u32 %v471, 2147483648
    %v612 = vxor.u32 %v474, 2147483648
    %v613 = vxor.u32 %v477, 2147483648
    %v614 = vxor.u32 %v480, 2147483648
    %v615 = vxor.u32 %v483, 2147483648
    %v616 = vxor.u32 %v486, 2147483648
    %v617 = vxor.u32 %v489, 2147483648
    %v618 = vxor.u32 %v492, 2147483648
    %v619 = vxor.u32 %v495, 2147483648
    %v620 = vxor.u32 %v498, 2147483648
    %v621 = vxor.u32 %v501, 2147483648
    %v622 = vxor.u32 %v504, 2147483648
    %v623 = vxor.u32 %v507, 2147483648
    %v624 = vxor.u32 %v510, 2147483648
    %v625 = vxor.u32 %v513, 2147483648
    %v626 = vxor.u32 %v516, 2147483648
    %v627 = vxor.u32 %v519, 2147483648
    %v628 = vxor.u32 %v522, 2147483648
    %v629 = vxor.u32 %v525, 2147483648
    %v630 = vxor.u32 %v528, 2147483648
    %v631 = vxor.u32 %v531, 2147483648
    %v632 = vxor.u32 %v534, 2147483648
    %v633 = vxor.u32 %v537, 2147483648
    %v634 = vxor.u32 %v540, 2147483648
    %v635 = vxor.u32 %v543, 2147483648
    %v636 = vxor.u32 %v546, 2147483648
    %v637 = vxor.u32 %v549, 2147483648
    %v638 = vxor.u32 %v552, 2147483648
    %v639 = vxor.u32 %v555, 2147483648
    %v640 = vxor.u32 %v558, 2147483648
    %v641 = vxor.u32 %v561, 2147483648
    %v642 = vxor.u32 %v564, 2147483648
    %v643 = vxor.u32 %v567, 2147483648
    %v644 = vxor.u32 %v570, 2147483648
    %v645 = vxor.u32 %v573, 2147483648
    %v646 = vxor.u32 %v576, 2147483648
    %v647 = vxor.u32 %v579, 2147483648
    %v648 = vxor.u32 %v582, 2147483648
    %v649 = vxor.u32 %v585, 2147483648
    %v650 = vmul.f32 %v586, 1.442695
    %v651 = vpow.pop %v650
    %v652 = vmul.f32 %v587, 1.442695
    %v653 = vpow.pop %v652
    %v654 = vmul.f32 %v588, 1.442695
    %v655 = vpow.pop %v654
    %v656 = vmul.f32 %v589, 1.442695
    %v657 = vpow.pop %v656
    %v658 = vmul.f32 %v590, 1.442695
    %v659 = vpow.pop %v658
    %v660 = vmul.f32 %v591, 1.442695
    %v661 = vpow.pop %v660
    %v662 = vmul.f32 %v592, 1.442695
    %v663 = vpow.pop %v662
    %v664 = vmul.f32 %v593, 1.442695
    %v665 = vpow.pop %v664
    %v666 = vmul.f32 %v594, 1.442695
    %v667 = vpow.pop %v666
    %v668 = vmul.f32 %v595, 1.442695
    %v669 = vpow.pop %v668
    %v670 = vmul.f32 %v596, 1.442695
    %v671 = vpow.pop %v670
    %v672 = vmul.f32 %v597, 1.442695
    %v673 = vpow.pop %v672
    %v674 = vmul.f32 %v598, 1.442695
    %v675 = vpow.pop %v674
    %v676 = vmul.f32 %v599, 1.442695
    %v677 = vpow.pop %v676
    %v678 = vmul.f32 %v600, 1.442695
    %v679 = vpow.pop %v678
    %v680 = vmul.f32 %v601, 1.442695
    %v681 = vpow.pop %v680
    %v682 = vmul.f32 %v602, 1.442695
    %v683 = vpow.pop %v682
    %v684 = vmul.f32 %v603, 1.442695
    %v685 = vpow.pop %v684
    %v686 = vmul.f32 %v604, 1.442695
    %v687 = vpow.pop %v686
    %v688 = vmul.f32 %v605, 1.442695
    %v689 = vpow.pop %v688
    %v690 = vmul.f32 %v606, 1.442695
    %v691 = vpow.pop %v690
    %v692 = vmul.f32 %v607, 1.442695
    %v693 = vpow.pop %v692
    %v694 = vmul.f32 %v608, 1.442695
    %v695 = vpow.pop %v694
    %v696 = vmul.f32 %v609, 1.442695
    %v697 = vpow.pop %v696
    %v698 = vmul.f32 %v610, 1.442695
    %v699 = vpow.pop %v698
    %v700 = vmul.f32 %v611, 1.442695
    %v701 = vpow.pop %v700
    %v702 = vmul.f32 %v612, 1.442695
    %v703 = vpow.pop %v702
    %v704 = vmul.f32 %v613, 1.442695
    %v705 = vpow.pop %v704
    %v706 = vmul.f32 %v614, 1.442695
    %v707 = vpow.pop %v706
    %v708 = vmul.f32 %v615, 1.442695
    %v709 = vpow.pop %v708
    %v710 = vmul.f32 %v616, 1.442695
    %v711 = vpow.pop %v710
    %v712 = vmul.f32 %v617, 1.442695
    %v713 = vpow.pop %v712
    %v714 = vmul.f32 %v618, 1.442695
    %v715 = vpow.pop %v714
    %v716 = vmul.f32 %v619, 1.442695
    %v717 = vpow.pop %v716
    %v718 = vmul.f32 %v620, 1.442695
    %v719 = vpow.pop %v718
    %v720 = vmul.f32 %v621, 1.442695
    %v721 = vpow.pop %v720
    %v722 = vmul.f32 %v622, 1.442695
    %v723 = vpow.pop %v722
    %v724 = vmul.f32 %v623, 1.442695
    %v725 = vpow.pop %v724
    %v726 = vmul.f32 %v624, 1.442695
    %v727 = vpow.pop %v726
    %v728 = vmul.f32 %v625, 1.442695
    %v729 = vpow.pop %v728
    %v730 = vmul.f32 %v626, 1.442695
    %v731 = vpow.pop %v730
    %v732 = vmul.f32 %v627, 1.442695
    %v733 = vpow.pop %v732
    %v734 = vmul.f32 %v628, 1.442695
    %v735 = vpow.pop %v734
    %v736 = vmul.f32 %v629, 1.442695
    %v737 = vpow.pop %v736
    %v738 = vmul.f32 %v630, 1.442695
    %v739 = vpow.pop %v738
    %v740 = vmul.f32 %v631, 1.442695
    %v741 = vpow.pop %v740
    %v742 = vmul.f32 %v632, 1.442695
    %v743 = vpow.pop %v742
    %v744 = vmul.f32 %v633, 1.442695
    %v745 = vpow.pop %v744
    %v746 = vmul.f32 %v634, 1.442695
    %v747 = vpow.pop %v746
    %v748 = vmul.f32 %v635, 1.442695
    %v749 = vpow.pop %v748
    %v750 = vmul.f32 %v636, 1.442695
    %v751 = vpow.pop %v750
    %v752 = vmul.f32 %v637, 1.442695
    %v753 = vpow.pop %v752
    %v754 = vmul.f32 %v638, 1.442695
    %v755 = vpow.pop %v754
    %v756 = vmul.f32 %v639, 1.442695
    %v757 = vpow.pop %v756
    %v758 = vmul.f32 %v640, 1.442695
    %v759 = vpow.pop %v758
    %v760 = vmul.f32 %v641, 1.442695
    %v761 = vpow.pop %v760
    %v762 = vmul.f32 %v642, 1.442695
    %v763 = vpow.pop %v762
    %v764 = vmul.f32 %v643, 1.442695
    %v765 = vpow.pop %v764
    %v766 = vmul.f32 %v644, 1.442695
    %v767 = vpow.pop %v766
    %v768 = vmul.f32 %v645, 1.442695
    %v769 = vpow.pop %v768
    %v770 = vmul.f32 %v646, 1.442695
    %v771 = vpow.pop %v770
    %v772 = vmul.f32 %v647, 1.442695
    %v773 = vpow.pop %v772
    %v774 = vmul.f32 %v648, 1.442695
    %v775 = vpow.pop %v774
    %v776 = vmul.f32 %v649, 1.442695
    %v777 = vpow.pop %v776
    %v778 = vadd.f32 %v651, 1.0
    %v779 = vadd.f32 %v653, 1.0
    %v780 = vadd.f32 %v655, 1.0
    %v781 = vadd.f32 %v657, 1.0
    %v782 = vadd.f32 %v659, 1.0
    %v783 = vadd.f32 %v661, 1.0
    %v784 = vadd.f32 %v663, 1.0
    %v785 = vadd.f32 %v665, 1.0
    %v786 = vadd.f32 %v667, 1.0
    %v787 = vadd.f32 %v669, 1.0
    %v788 = vadd.f32 %v671, 1.0
    %v789 = vadd.f32 %v673, 1.0
    %v790 = vadd.f32 %v675, 1.0
    %v791 = vadd.f32 %v677, 1.0
    %v792 = vadd.f32 %v679, 1.0
    %v793 = vadd.f32 %v681, 1.0
    %v794 = vadd.f32 %v683, 1.0
    %v795 = vadd.f32 %v685, 1.0
    %v796 = vadd.f32 %v687, 1.0
    %v797 = vadd.f32 %v689, 1.0
    %v798 = vadd.f32 %v691, 1.0
    %v799 = vadd.f32 %v693, 1.0
    %v800 = vadd.f32 %v695, 1.0
    %v801 = vadd.f32 %v697, 1.0
    %v802 = vadd.f32 %v699, 1.0
    %v803 = vadd.f32 %v701, 1.0
    %v804 = vadd.f32 %v703, 1.0
    %v805 = vadd.f32 %v705, 1.0
    %v806 = vadd.f32 %v707, 1.0
    %v807 = vadd.f32 %v709, 1.0
    %v808 = vadd.f32 %v711, 1.0
    %v809 = vadd.f32 %v713, 1.0
    %v810 = vadd.f32 %v715, 1.0
    %v811 = vadd.f32 %v717, 1.0
    %v812 = vadd.f32 %v719, 1.0
    %v813 = vadd.f32 %v721, 1.0
    %v814 = vadd.f32 %v723, 1.0
    %v815 = vadd.f32 %v725, 1.0
    %v816 = vadd.f32 %v727, 1.0
    %v817 = vadd.f32 %v729, 1.0
    %v818 = vadd.f32 %v731, 1.0
    %v819 = vadd.f32 %v733, 1.0
    %v820 = vadd.f32 %v735, 1.0
    %v821 = vadd.f32 %v737, 1.0
    %v822 = vadd.f32 %v739, 1.0
    %v823 = vadd.f32 %v741, 1.0
    %v824 = vadd.f32 %v743, 1.0
    %v825 = vadd.f32 %v745, 1.0
    %v826 = vadd.f32 %v747, 1.0
    %v827 = vadd.f32 %v749, 1.0
    %v828 = vadd.f32 %v751, 1.0
    %v829 = vadd.f32 %v753, 1.0
    %v830 = vadd.f32 %v755, 1.0
    %v831 = vadd.f32 %v757, 1.0
    %v832 = vadd.f32 %v759, 1.0
    %v833 = vadd.f32 %v761, 1.0
    %v834 = vadd.f32 %v763, 1.0
    %v835 = vadd.f32 %v765, 1.0
    %v836 = vadd.f32 %v767, 1.0
    %v837 = vadd.f32 %v769, 1.0
    %v838 = vadd.f32 %v771, 1.0
    %v839 = vadd.f32 %v773, 1.0
    %v840 = vadd.f32 %v775, 1.0
    %v841 = vadd.f32 %v777, 1.0
    %v842 = vrcp.pop %v778
    %v843 = vmul.f32 %v778, %v842
    %v844 = vsub.f32 1.0, %v843
    %v845 = vmul.f32 %v842, %v844
    %v846 = vadd.f32 %v842, %v845
    %vm847 = vweird.f32 %v778
    %vm848 = vweird.f32 %v842
    %vm849 = vmor %vm847, %vm848
    %v850 = vsel %vm849, %v842, %v846
    %v851 = vand.u32 2147483647, %v778
    %vm852 = vcmp.eq.f32.partialorder %v851, 8.507059e+37
    %v853 = vand.u32 %v778, 2147483648
    %v854 = vor.u32 1.1754944e-38, %v853
    %v855 = vsel %vm852, %v854, %v850
    %v856 = vmul.f32 1.0, %v855
    %v857 = vrcp.pop %v779
    %v858 = vmul.f32 %v779, %v857
    %v859 = vsub.f32 1.0, %v858
    %v860 = vmul.f32 %v857, %v859
    %v861 = vadd.f32 %v857, %v860
    %vm862 = vweird.f32 %v779
    %vm863 = vweird.f32 %v857
    %vm864 = vmor %vm862, %vm863
    %v865 = vsel %vm864, %v857, %v861
    %v866 = vand.u32 2147483647, %v779
    %vm867 = vcmp.eq.f32.partialorder %v866, 8.507059e+37
    %v868 = vand.u32 %v779, 2147483648
    %v869 = vor.u32 1.1754944e-38, %v868
    %v870 = vsel %vm867, %v869, %v865
    %v871 = vmul.f32 1.0, %v870
    %v872 = vrcp.pop %v780
    %v873 = vmul.f32 %v780, %v872
    %v874 = vsub.f32 1.0, %v873
    %v875 = vmul.f32 %v872, %v874
    %v876 = vadd.f32 %v872, %v875
    %vm877 = vweird.f32 %v780
    %vm878 = vweird.f32 %v872
    %vm879 = vmor %vm877, %vm878
    %v880 = vsel %vm879, %v872, %v876
    %v881 = vand.u32 2147483647, %v780
    %vm882 = vcmp.eq.f32.partialorder %v881, 8.507059e+37
    %v883 = vand.u32 %v780, 2147483648
    %v884 = vor.u32 1.1754944e-38, %v883
    %v885 = vsel %vm882, %v884, %v880
    %v886 = vmul.f32 1.0, %v885
    %v887 = vrcp.pop %v781
    %v888 = vmul.f32 %v781, %v887
    %v889 = vsub.f32 1.0, %v888
    %v890 = vmul.f32 %v887, %v889
    %v891 = vadd.f32 %v887, %v890
    %vm892 = vweird.f32 %v781
    %vm893 = vweird.f32 %v887
    %vm894 = vmor %vm892, %vm893
    %v895 = vsel %vm894, %v887, %v891
    %v896 = vand.u32 2147483647, %v781
    %vm897 = vcmp.eq.f32.partialorder %v896, 8.507059e+37
    %v898 = vand.u32 %v781, 2147483648
    %v899 = vor.u32 1.1754944e-38, %v898
    %v900 = vsel %vm897, %v899, %v895
    %v901 = vmul.f32 1.0, %v900
    %v902 = vrcp.pop %v782
    %v903 = vmul.f32 %v782, %v902
    %v904 = vsub.f32 1.0, %v903
    %v905 = vmul.f32 %v902, %v904
    %v906 = vadd.f32 %v902, %v905
    %vm907 = vweird.f32 %v782
    %vm908 = vweird.f32 %v902
    %vm909 = vmor %vm907, %vm908
    %v910 = vsel %vm909, %v902, %v906
    %v911 = vand.u32 2147483647, %v782
    %vm912 = vcmp.eq.f32.partialorder %v911, 8.507059e+37
    %v913 = vand.u32 %v782, 2147483648
    %v914 = vor.u32 1.1754944e-38, %v913
    %v915 = vsel %vm912, %v914, %v910
    %v916 = vmul.f32 1.0, %v915
    %v917 = vrcp.pop %v783
    %v918 = vmul.f32 %v783, %v917
    %v919 = vsub.f32 1.0, %v918
    %v920 = vmul.f32 %v917, %v919
    %v921 = vadd.f32 %v917, %v920
    %vm922 = vweird.f32 %v783
    %vm923 = vweird.f32 %v917
    %vm924 = vmor %vm922, %vm923
    %v925 = vsel %vm924, %v917, %v921
    %v926 = vand.u32 2147483647, %v783
    %vm927 = vcmp.eq.f32.partialorder %v926, 8.507059e+37
    %v928 = vand.u32 %v783, 2147483648
    %v929 = vor.u32 1.1754944e-38, %v928
    %v930 = vsel %vm927, %v929, %v925
    %v931 = vmul.f32 1.0, %v930
    %v932 = vrcp.pop %v784
    %v933 = vmul.f32 %v784, %v932
    %v934 = vsub.f32 1.0, %v933
    %v935 = vmul.f32 %v932, %v934
    %v936 = vadd.f32 %v932, %v935
    %vm937 = vweird.f32 %v784
    %vm938 = vweird.f32 %v932
    %vm939 = vmor %vm937, %vm938
    %v940 = vsel %vm939, %v932, %v936
    %v941 = vand.u32 2147483647, %v784
    %vm942 = vcmp.eq.f32.partialorder %v941, 8.507059e+37
    %v943 = vand.u32 %v784, 2147483648
    %v944 = vor.u32 1.1754944e-38, %v943
    %v945 = vsel %vm942, %v944, %v940
    %v946 = vmul.f32 1.0, %v945
    %v947 = vrcp.pop %v785
    %v948 = vmul.f32 %v785, %v947
    %v949 = vsub.f32 1.0, %v948
    %v950 = vmul.f32 %v947, %v949
    %v951 = vadd.f32 %v947, %v950
    %vm952 = vweird.f32 %v785
    %vm953 = vweird.f32 %v947
    %vm954 = vmor %vm952, %vm953
    %v955 = vsel %vm954, %v947, %v951
    %v956 = vand.u32 2147483647, %v785
    %vm957 = vcmp.eq.f32.partialorder %v956, 8.507059e+37
    %v958 = vand.u32 %v785, 2147483648
    %v959 = vor.u32 1.1754944e-38, %v958
    %v960 = vsel %vm957, %v959, %v955
    %v961 = vmul.f32 1.0, %v960
    %v962 = vrcp.pop %v786
    %v963 = vmul.f32 %v786, %v962
    %v964 = vsub.f32 1.0, %v963
    %v965 = vmul.f32 %v962, %v964
    %v966 = vadd.f32 %v962, %v965
    %vm967 = vweird.f32 %v786
    %vm968 = vweird.f32 %v962
    %vm969 = vmor %vm967, %vm968
    %v970 = vsel %vm969, %v962, %v966
    %v971 = vand.u32 2147483647, %v786
    %vm972 = vcmp.eq.f32.partialorder %v971, 8.507059e+37
    %v973 = vand.u32 %v786, 2147483648
    %v974 = vor.u32 1.1754944e-38, %v973
    %v975 = vsel %vm972, %v974, %v970
    %v976 = vmul.f32 1.0, %v975
    %v977 = vrcp.pop %v787
    %v978 = vmul.f32 %v787, %v977
    %v979 = vsub.f32 1.0, %v978
    %v980 = vmul.f32 %v977, %v979
    %v981 = vadd.f32 %v977, %v980
    %vm982 = vweird.f32 %v787
    %vm983 = vweird.f32 %v977
    %vm984 = vmor %vm982, %vm983
    %v985 = vsel %vm984, %v977, %v981
    %v986 = vand.u32 2147483647, %v787
    %vm987 = vcmp.eq.f32.partialorder %v986, 8.507059e+37
    %v988 = vand.u32 %v787, 2147483648
    %v989 = vor.u32 1.1754944e-38, %v988
    %v990 = vsel %vm987, %v989, %v985
    %v991 = vmul.f32 1.0, %v990
    %v992 = vrcp.pop %v788
    %v993 = vmul.f32 %v788, %v992
    %v994 = vsub.f32 1.0, %v993
    %v995 = vmul.f32 %v992, %v994
    %v996 = vadd.f32 %v992, %v995
    %vm997 = vweird.f32 %v788
    %vm998 = vweird.f32 %v992
    %vm999 = vmor %vm997, %vm998
    %v1000 = vsel %vm999, %v992, %v996
    %v1001 = vand.u32 2147483647, %v788
    %vm1002 = vcmp.eq.f32.partialorder %v1001, 8.507059e+37
    %v1003 = vand.u32 %v788, 2147483648
    %v1004 = vor.u32 1.1754944e-38, %v1003
    %v1005 = vsel %vm1002, %v1004, %v1000
    %v1006 = vmul.f32 1.0, %v1005
    %v1007 = vrcp.pop %v789
    %v1008 = vmul.f32 %v789, %v1007
    %v1009 = vsub.f32 1.0, %v1008
    %v1010 = vmul.f32 %v1007, %v1009
    %v1011 = vadd.f32 %v1007, %v1010
    %vm1012 = vweird.f32 %v789
    %vm1013 = vweird.f32 %v1007
    %vm1014 = vmor %vm1012, %vm1013
    %v1015 = vsel %vm1014, %v1007, %v1011
    %v1016 = vand.u32 2147483647, %v789
    %vm1017 = vcmp.eq.f32.partialorder %v1016, 8.507059e+37
    %v1018 = vand.u32 %v789, 2147483648
    %v1019 = vor.u32 1.1754944e-38, %v1018
    %v1020 = vsel %vm1017, %v1019, %v1015
    %v1021 = vmul.f32 1.0, %v1020
    %v1022 = vrcp.pop %v790
    %v1023 = vmul.f32 %v790, %v1022
    %v1024 = vsub.f32 1.0, %v1023
    %v1025 = vmul.f32 %v1022, %v1024
    %v1026 = vadd.f32 %v1022, %v1025
    %vm1027 = vweird.f32 %v790
    %vm1028 = vweird.f32 %v1022
    %vm1029 = vmor %vm1027, %vm1028
    %v1030 = vsel %vm1029, %v1022, %v1026
    %v1031 = vand.u32 2147483647, %v790
    %vm1032 = vcmp.eq.f32.partialorder %v1031, 8.507059e+37
    %v1033 = vand.u32 %v790, 2147483648
    %v1034 = vor.u32 1.1754944e-38, %v1033
    %v1035 = vsel %vm1032, %v1034, %v1030
    %v1036 = vmul.f32 1.0, %v1035
    %v1037 = vrcp.pop %v791
    %v1038 = vmul.f32 %v791, %v1037
    %v1039 = vsub.f32 1.0, %v1038
    %v1040 = vmul.f32 %v1037, %v1039
    %v1041 = vadd.f32 %v1037, %v1040
    %vm1042 = vweird.f32 %v791
    %vm1043 = vweird.f32 %v1037
    %vm1044 = vmor %vm1042, %vm1043
    %v1045 = vsel %vm1044, %v1037, %v1041
    %v1046 = vand.u32 2147483647, %v791
    %vm1047 = vcmp.eq.f32.partialorder %v1046, 8.507059e+37
    %v1048 = vand.u32 %v791, 2147483648
    %v1049 = vor.u32 1.1754944e-38, %v1048
    %v1050 = vsel %vm1047, %v1049, %v1045
    %v1051 = vmul.f32 1.0, %v1050
    %v1052 = vrcp.pop %v792
    %v1053 = vmul.f32 %v792, %v1052
    %v1054 = vsub.f32 1.0, %v1053
    %v1055 = vmul.f32 %v1052, %v1054
    %v1056 = vadd.f32 %v1052, %v1055
    %vm1057 = vweird.f32 %v792
    %vm1058 = vweird.f32 %v1052
    %vm1059 = vmor %vm1057, %vm1058
    %v1060 = vsel %vm1059, %v1052, %v1056
    %v1061 = vand.u32 2147483647, %v792
    %vm1062 = vcmp.eq.f32.partialorder %v1061, 8.507059e+37
    %v1063 = vand.u32 %v792, 2147483648
    %v1064 = vor.u32 1.1754944e-38, %v1063
    %v1065 = vsel %vm1062, %v1064, %v1060
    %v1066 = vmul.f32 1.0, %v1065
    %v1067 = vrcp.pop %v793
    %v1068 = vmul.f32 %v793, %v1067
    %v1069 = vsub.f32 1.0, %v1068
    %v1070 = vmul.f32 %v1067, %v1069
    %v1071 = vadd.f32 %v1067, %v1070
    %vm1072 = vweird.f32 %v793
    %vm1073 = vweird.f32 %v1067
    %vm1074 = vmor %vm1072, %vm1073
    %v1075 = vsel %vm1074, %v1067, %v1071
    %v1076 = vand.u32 2147483647, %v793
    %vm1077 = vcmp.eq.f32.partialorder %v1076, 8.507059e+37
    %v1078 = vand.u32 %v793, 2147483648
    %v1079 = vor.u32 1.1754944e-38, %v1078
    %v1080 = vsel %vm1077, %v1079, %v1075
    %v1081 = vmul.f32 1.0, %v1080
    %v1082 = vrcp.pop %v794
    %v1083 = vmul.f32 %v794, %v1082
    %v1084 = vsub.f32 1.0, %v1083
    %v1085 = vmul.f32 %v1082, %v1084
    %v1086 = vadd.f32 %v1082, %v1085
    %vm1087 = vweird.f32 %v794
    %vm1088 = vweird.f32 %v1082
    %vm1089 = vmor %vm1087, %vm1088
    %v1090 = vsel %vm1089, %v1082, %v1086
    %v1091 = vand.u32 2147483647, %v794
    %vm1092 = vcmp.eq.f32.partialorder %v1091, 8.507059e+37
    %v1093 = vand.u32 %v794, 2147483648
    %v1094 = vor.u32 1.1754944e-38, %v1093
    %v1095 = vsel %vm1092, %v1094, %v1090
    %v1096 = vmul.f32 1.0, %v1095
    %v1097 = vrcp.pop %v795
    %v1098 = vmul.f32 %v795, %v1097
    %v1099 = vsub.f32 1.0, %v1098
    %v1100 = vmul.f32 %v1097, %v1099
    %v1101 = vadd.f32 %v1097, %v1100
    %vm1102 = vweird.f32 %v795
    %vm1103 = vweird.f32 %v1097
    %vm1104 = vmor %vm1102, %vm1103
    %v1105 = vsel %vm1104, %v1097, %v1101
    %v1106 = vand.u32 2147483647, %v795
    %vm1107 = vcmp.eq.f32.partialorder %v1106, 8.507059e+37
    %v1108 = vand.u32 %v795, 2147483648
    %v1109 = vor.u32 1.1754944e-38, %v1108
    %v1110 = vsel %vm1107, %v1109, %v1105
    %v1111 = vmul.f32 1.0, %v1110
    %v1112 = vrcp.pop %v796
    %v1113 = vmul.f32 %v796, %v1112
    %v1114 = vsub.f32 1.0, %v1113
    %v1115 = vmul.f32 %v1112, %v1114
    %v1116 = vadd.f32 %v1112, %v1115
    %vm1117 = vweird.f32 %v796
    %vm1118 = vweird.f32 %v1112
    %vm1119 = vmor %vm1117, %vm1118
    %v1120 = vsel %vm1119, %v1112, %v1116
    %v1121 = vand.u32 2147483647, %v796
    %vm1122 = vcmp.eq.f32.partialorder %v1121, 8.507059e+37
    %v1123 = vand.u32 %v796, 2147483648
    %v1124 = vor.u32 1.1754944e-38, %v1123
    %v1125 = vsel %vm1122, %v1124, %v1120
    %v1126 = vmul.f32 1.0, %v1125
    %v1127 = vrcp.pop %v797
    %v1128 = vmul.f32 %v797, %v1127
    %v1129 = vsub.f32 1.0, %v1128
    %v1130 = vmul.f32 %v1127, %v1129
    %v1131 = vadd.f32 %v1127, %v1130
    %vm1132 = vweird.f32 %v797
    %vm1133 = vweird.f32 %v1127
    %vm1134 = vmor %vm1132, %vm1133
    %v1135 = vsel %vm1134, %v1127, %v1131
    %v1136 = vand.u32 2147483647, %v797
    %vm1137 = vcmp.eq.f32.partialorder %v1136, 8.507059e+37
    %v1138 = vand.u32 %v797, 2147483648
    %v1139 = vor.u32 1.1754944e-38, %v1138
    %v1140 = vsel %vm1137, %v1139, %v1135
    %v1141 = vmul.f32 1.0, %v1140
    %v1142 = vrcp.pop %v798
    %v1143 = vmul.f32 %v798, %v1142
    %v1144 = vsub.f32 1.0, %v1143
    %v1145 = vmul.f32 %v1142, %v1144
    %v1146 = vadd.f32 %v1142, %v1145
    %vm1147 = vweird.f32 %v798
    %vm1148 = vweird.f32 %v1142
    %vm1149 = vmor %vm1147, %vm1148
    %v1150 = vsel %vm1149, %v1142, %v1146
    %v1151 = vand.u32 2147483647, %v798
    %vm1152 = vcmp.eq.f32.partialorder %v1151, 8.507059e+37
    %v1153 = vand.u32 %v798, 2147483648
    %v1154 = vor.u32 1.1754944e-38, %v1153
    %v1155 = vsel %vm1152, %v1154, %v1150
    %v1156 = vmul.f32 1.0, %v1155
    %v1157 = vrcp.pop %v799
    %v1158 = vmul.f32 %v799, %v1157
    %v1159 = vsub.f32 1.0, %v1158
    %v1160 = vmul.f32 %v1157, %v1159
    %v1161 = vadd.f32 %v1157, %v1160
    %vm1162 = vweird.f32 %v799
    %vm1163 = vweird.f32 %v1157
    %vm1164 = vmor %vm1162, %vm1163
    %v1165 = vsel %vm1164, %v1157, %v1161
    %v1166 = vand.u32 2147483647, %v799
    %vm1167 = vcmp.eq.f32.partialorder %v1166, 8.507059e+37
    %v1168 = vand.u32 %v799, 2147483648
    %v1169 = vor.u32 1.1754944e-38, %v1168
    %v1170 = vsel %vm1167, %v1169, %v1165
    %v1171 = vmul.f32 1.0, %v1170
    %v1172 = vrcp.pop %v800
    %v1173 = vmul.f32 %v800, %v1172
    %v1174 = vsub.f32 1.0, %v1173
    %v1175 = vmul.f32 %v1172, %v1174
    %v1176 = vadd.f32 %v1172, %v1175
    %vm1177 = vweird.f32 %v800
    %vm1178 = vweird.f32 %v1172
    %vm1179 = vmor %vm1177, %vm1178
    %v1180 = vsel %vm1179, %v1172, %v1176
    %v1181 = vand.u32 2147483647, %v800
    %vm1182 = vcmp.eq.f32.partialorder %v1181, 8.507059e+37
    %v1183 = vand.u32 %v800, 2147483648
    %v1184 = vor.u32 1.1754944e-38, %v1183
    %v1185 = vsel %vm1182, %v1184, %v1180
    %v1186 = vmul.f32 1.0, %v1185
    %v1187 = vrcp.pop %v801
    %v1188 = vmul.f32 %v801, %v1187
    %v1189 = vsub.f32 1.0, %v1188
    %v1190 = vmul.f32 %v1187, %v1189
    %v1191 = vadd.f32 %v1187, %v1190
    %vm1192 = vweird.f32 %v801
    %vm1193 = vweird.f32 %v1187
    %vm1194 = vmor %vm1192, %vm1193
    %v1195 = vsel %vm1194, %v1187, %v1191
    %v1196 = vand.u32 2147483647, %v801
    %vm1197 = vcmp.eq.f32.partialorder %v1196, 8.507059e+37
    %v1198 = vand.u32 %v801, 2147483648
    %v1199 = vor.u32 1.1754944e-38, %v1198
    %v1200 = vsel %vm1197, %v1199, %v1195
    %v1201 = vmul.f32 1.0, %v1200
    %v1202 = vrcp.pop %v802
    %v1203 = vmul.f32 %v802, %v1202
    %v1204 = vsub.f32 1.0, %v1203
    %v1205 = vmul.f32 %v1202, %v1204
    %v1206 = vadd.f32 %v1202, %v1205
    %vm1207 = vweird.f32 %v802
    %vm1208 = vweird.f32 %v1202
    %vm1209 = vmor %vm1207, %vm1208
    %v1210 = vsel %vm1209, %v1202, %v1206
    %v1211 = vand.u32 2147483647, %v802
    %vm1212 = vcmp.eq.f32.partialorder %v1211, 8.507059e+37
    %v1213 = vand.u32 %v802, 2147483648
    %v1214 = vor.u32 1.1754944e-38, %v1213
    %v1215 = vsel %vm1212, %v1214, %v1210
    %v1216 = vmul.f32 1.0, %v1215
    %v1217 = vrcp.pop %v803
    %v1218 = vmul.f32 %v803, %v1217
    %v1219 = vsub.f32 1.0, %v1218
    %v1220 = vmul.f32 %v1217, %v1219
    %v1221 = vadd.f32 %v1217, %v1220
    %vm1222 = vweird.f32 %v803
    %vm1223 = vweird.f32 %v1217
    %vm1224 = vmor %vm1222, %vm1223
    %v1225 = vsel %vm1224, %v1217, %v1221
    %v1226 = vand.u32 2147483647, %v803
    %vm1227 = vcmp.eq.f32.partialorder %v1226, 8.507059e+37
    %v1228 = vand.u32 %v803, 2147483648
    %v1229 = vor.u32 1.1754944e-38, %v1228
    %v1230 = vsel %vm1227, %v1229, %v1225
    %v1231 = vmul.f32 1.0, %v1230
    %v1232 = vrcp.pop %v804
    %v1233 = vmul.f32 %v804, %v1232
    %v1234 = vsub.f32 1.0, %v1233
    %v1235 = vmul.f32 %v1232, %v1234
    %v1236 = vadd.f32 %v1232, %v1235
    %vm1237 = vweird.f32 %v804
    %vm1238 = vweird.f32 %v1232
    %vm1239 = vmor %vm1237, %vm1238
    %v1240 = vsel %vm1239, %v1232, %v1236
    %v1241 = vand.u32 2147483647, %v804
    %vm1242 = vcmp.eq.f32.partialorder %v1241, 8.507059e+37
    %v1243 = vand.u32 %v804, 2147483648
    %v1244 = vor.u32 1.1754944e-38, %v1243
    %v1245 = vsel %vm1242, %v1244, %v1240
    %v1246 = vmul.f32 1.0, %v1245
    %v1247 = vrcp.pop %v805
    %v1248 = vmul.f32 %v805, %v1247
    %v1249 = vsub.f32 1.0, %v1248
    %v1250 = vmul.f32 %v1247, %v1249
    %v1251 = vadd.f32 %v1247, %v1250
    %vm1252 = vweird.f32 %v805
    %vm1253 = vweird.f32 %v1247
    %vm1254 = vmor %vm1252, %vm1253
    %v1255 = vsel %vm1254, %v1247, %v1251
    %v1256 = vand.u32 2147483647, %v805
    %vm1257 = vcmp.eq.f32.partialorder %v1256, 8.507059e+37
    %v1258 = vand.u32 %v805, 2147483648
    %v1259 = vor.u32 1.1754944e-38, %v1258
    %v1260 = vsel %vm1257, %v1259, %v1255
    %v1261 = vmul.f32 1.0, %v1260
    %v1262 = vrcp.pop %v806
    %v1263 = vmul.f32 %v806, %v1262
    %v1264 = vsub.f32 1.0, %v1263
    %v1265 = vmul.f32 %v1262, %v1264
    %v1266 = vadd.f32 %v1262, %v1265
    %vm1267 = vweird.f32 %v806
    %vm1268 = vweird.f32 %v1262
    %vm1269 = vmor %vm1267, %vm1268
    %v1270 = vsel %vm1269, %v1262, %v1266
    %v1271 = vand.u32 2147483647, %v806
    %vm1272 = vcmp.eq.f32.partialorder %v1271, 8.507059e+37
    %v1273 = vand.u32 %v806, 2147483648
    %v1274 = vor.u32 1.1754944e-38, %v1273
    %v1275 = vsel %vm1272, %v1274, %v1270
    %v1276 = vmul.f32 1.0, %v1275
    %v1277 = vrcp.pop %v807
    %v1278 = vmul.f32 %v807, %v1277
    %v1279 = vsub.f32 1.0, %v1278
    %v1280 = vmul.f32 %v1277, %v1279
    %v1281 = vadd.f32 %v1277, %v1280
    %vm1282 = vweird.f32 %v807
    %vm1283 = vweird.f32 %v1277
    %vm1284 = vmor %vm1282, %vm1283
    %v1285 = vsel %vm1284, %v1277, %v1281
    %v1286 = vand.u32 2147483647, %v807
    %vm1287 = vcmp.eq.f32.partialorder %v1286, 8.507059e+37
    %v1288 = vand.u32 %v807, 2147483648
    %v1289 = vor.u32 1.1754944e-38, %v1288
    %v1290 = vsel %vm1287, %v1289, %v1285
    %v1291 = vmul.f32 1.0, %v1290
    %v1292 = vrcp.pop %v808
    %v1293 = vmul.f32 %v808, %v1292
    %v1294 = vsub.f32 1.0, %v1293
    %v1295 = vmul.f32 %v1292, %v1294
    %v1296 = vadd.f32 %v1292, %v1295
    %vm1297 = vweird.f32 %v808
    %vm1298 = vweird.f32 %v1292
    %vm1299 = vmor %vm1297, %vm1298
    %v1300 = vsel %vm1299, %v1292, %v1296
    %v1301 = vand.u32 2147483647, %v808
    %vm1302 = vcmp.eq.f32.partialorder %v1301, 8.507059e+37
    %v1303 = vand.u32 %v808, 2147483648
    %v1304 = vor.u32 1.1754944e-38, %v1303
    %v1305 = vsel %vm1302, %v1304, %v1300
    %v1306 = vmul.f32 1.0, %v1305
    %v1307 = vrcp.pop %v809
    %v1308 = vmul.f32 %v809, %v1307
    %v1309 = vsub.f32 1.0, %v1308
    %v1310 = vmul.f32 %v1307, %v1309
    %v1311 = vadd.f32 %v1307, %v1310
    %vm1312 = vweird.f32 %v809
    %vm1313 = vweird.f32 %v1307
    %vm1314 = vmor %vm1312, %vm1313
    %v1315 = vsel %vm1314, %v1307, %v1311
    %v1316 = vand.u32 2147483647, %v809
    %vm1317 = vcmp.eq.f32.partialorder %v1316, 8.507059e+37
    %v1318 = vand.u32 %v809, 2147483648
    %v1319 = vor.u32 1.1754944e-38, %v1318
    %v1320 = vsel %vm1317, %v1319, %v1315
    %v1321 = vmul.f32 1.0, %v1320
    %v1322 = vrcp.pop %v810
    %v1323 = vmul.f32 %v810, %v1322
    %v1324 = vsub.f32 1.0, %v1323
    %v1325 = vmul.f32 %v1322, %v1324
    %v1326 = vadd.f32 %v1322, %v1325
    %vm1327 = vweird.f32 %v810
    %vm1328 = vweird.f32 %v1322
    %vm1329 = vmor %vm1327, %vm1328
    %v1330 = vsel %vm1329, %v1322, %v1326
    %v1331 = vand.u32 2147483647, %v810
    %vm1332 = vcmp.eq.f32.partialorder %v1331, 8.507059e+37
    %v1333 = vand.u32 %v810, 2147483648
    %v1334 = vor.u32 1.1754944e-38, %v1333
    %v1335 = vsel %vm1332, %v1334, %v1330
    %v1336 = vmul.f32 1.0, %v1335
    %v1337 = vrcp.pop %v811
    %v1338 = vmul.f32 %v811, %v1337
    %v1339 = vsub.f32 1.0, %v1338
    %v1340 = vmul.f32 %v1337, %v1339
    %v1341 = vadd.f32 %v1337, %v1340
    %vm1342 = vweird.f32 %v811
    %vm1343 = vweird.f32 %v1337
    %vm1344 = vmor %vm1342, %vm1343
    %v1345 = vsel %vm1344, %v1337, %v1341
    %v1346 = vand.u32 2147483647, %v811
    %vm1347 = vcmp.eq.f32.partialorder %v1346, 8.507059e+37
    %v1348 = vand.u32 %v811, 2147483648
    %v1349 = vor.u32 1.1754944e-38, %v1348
    %v1350 = vsel %vm1347, %v1349, %v1345
    %v1351 = vmul.f32 1.0, %v1350
    %v1352 = vrcp.pop %v812
    %v1353 = vmul.f32 %v812, %v1352
    %v1354 = vsub.f32 1.0, %v1353
    %v1355 = vmul.f32 %v1352, %v1354
    %v1356 = vadd.f32 %v1352, %v1355
    %vm1357 = vweird.f32 %v812
    %vm1358 = vweird.f32 %v1352
    %vm1359 = vmor %vm1357, %vm1358
    %v1360 = vsel %vm1359, %v1352, %v1356
    %v1361 = vand.u32 2147483647, %v812
    %vm1362 = vcmp.eq.f32.partialorder %v1361, 8.507059e+37
    %v1363 = vand.u32 %v812, 2147483648
    %v1364 = vor.u32 1.1754944e-38, %v1363
    %v1365 = vsel %vm1362, %v1364, %v1360
    %v1366 = vmul.f32 1.0, %v1365
    %v1367 = vrcp.pop %v813
    %v1368 = vmul.f32 %v813, %v1367
    %v1369 = vsub.f32 1.0, %v1368
    %v1370 = vmul.f32 %v1367, %v1369
    %v1371 = vadd.f32 %v1367, %v1370
    %vm1372 = vweird.f32 %v813
    %vm1373 = vweird.f32 %v1367
    %vm1374 = vmor %vm1372, %vm1373
    %v1375 = vsel %vm1374, %v1367, %v1371
    %v1376 = vand.u32 2147483647, %v813
    %vm1377 = vcmp.eq.f32.partialorder %v1376, 8.507059e+37
    %v1378 = vand.u32 %v813, 2147483648
    %v1379 = vor.u32 1.1754944e-38, %v1378
    %v1380 = vsel %vm1377, %v1379, %v1375
    %v1381 = vmul.f32 1.0, %v1380
    %v1382 = vrcp.pop %v814
    %v1383 = vmul.f32 %v814, %v1382
    %v1384 = vsub.f32 1.0, %v1383
    %v1385 = vmul.f32 %v1382, %v1384
    %v1386 = vadd.f32 %v1382, %v1385
    %vm1387 = vweird.f32 %v814
    %vm1388 = vweird.f32 %v1382
    %vm1389 = vmor %vm1387, %vm1388
    %v1390 = vsel %vm1389, %v1382, %v1386
    %v1391 = vand.u32 2147483647, %v814
    %vm1392 = vcmp.eq.f32.partialorder %v1391, 8.507059e+37
    %v1393 = vand.u32 %v814, 2147483648
    %v1394 = vor.u32 1.1754944e-38, %v1393
    %v1395 = vsel %vm1392, %v1394, %v1390
    %v1396 = vmul.f32 1.0, %v1395
    %v1397 = vrcp.pop %v815
    %v1398 = vmul.f32 %v815, %v1397
    %v1399 = vsub.f32 1.0, %v1398
    %v1400 = vmul.f32 %v1397, %v1399
    %v1401 = vadd.f32 %v1397, %v1400
    %vm1402 = vweird.f32 %v815
    %vm1403 = vweird.f32 %v1397
    %vm1404 = vmor %vm1402, %vm1403
    %v1405 = vsel %vm1404, %v1397, %v1401
    %v1406 = vand.u32 2147483647, %v815
    %vm1407 = vcmp.eq.f32.partialorder %v1406, 8.507059e+37
    %v1408 = vand.u32 %v815, 2147483648
    %v1409 = vor.u32 1.1754944e-38, %v1408
    %v1410 = vsel %vm1407, %v1409, %v1405
    %v1411 = vmul.f32 1.0, %v1410
    %v1412 = vrcp.pop %v816
    %v1413 = vmul.f32 %v816, %v1412
    %v1414 = vsub.f32 1.0, %v1413
    %v1415 = vmul.f32 %v1412, %v1414
    %v1416 = vadd.f32 %v1412, %v1415
    %vm1417 = vweird.f32 %v816
    %vm1418 = vweird.f32 %v1412
    %vm1419 = vmor %vm1417, %vm1418
    %v1420 = vsel %vm1419, %v1412, %v1416
    %v1421 = vand.u32 2147483647, %v816
    %vm1422 = vcmp.eq.f32.partialorder %v1421, 8.507059e+37
    %v1423 = vand.u32 %v816, 2147483648
    %v1424 = vor.u32 1.1754944e-38, %v1423
    %v1425 = vsel %vm1422, %v1424, %v1420
    %v1426 = vmul.f32 1.0, %v1425
    %v1427 = vrcp.pop %v817
    %v1428 = vmul.f32 %v817, %v1427
    %v1429 = vsub.f32 1.0, %v1428
    %v1430 = vmul.f32 %v1427, %v1429
    %v1431 = vadd.f32 %v1427, %v1430
    %vm1432 = vweird.f32 %v817
    %vm1433 = vweird.f32 %v1427
    %vm1434 = vmor %vm1432, %vm1433
    %v1435 = vsel %vm1434, %v1427, %v1431
    %v1436 = vand.u32 2147483647, %v817
    %vm1437 = vcmp.eq.f32.partialorder %v1436, 8.507059e+37
    %v1438 = vand.u32 %v817, 2147483648
    %v1439 = vor.u32 1.1754944e-38, %v1438
    %v1440 = vsel %vm1437, %v1439, %v1435
    %v1441 = vmul.f32 1.0, %v1440
    %v1442 = vrcp.pop %v818
    %v1443 = vmul.f32 %v818, %v1442
    %v1444 = vsub.f32 1.0, %v1443
    %v1445 = vmul.f32 %v1442, %v1444
    %v1446 = vadd.f32 %v1442, %v1445
    %vm1447 = vweird.f32 %v818
    %vm1448 = vweird.f32 %v1442
    %vm1449 = vmor %vm1447, %vm1448
    %v1450 = vsel %vm1449, %v1442, %v1446
    %v1451 = vand.u32 2147483647, %v818
    %vm1452 = vcmp.eq.f32.partialorder %v1451, 8.507059e+37
    %v1453 = vand.u32 %v818, 2147483648
    %v1454 = vor.u32 1.1754944e-38, %v1453
    %v1455 = vsel %vm1452, %v1454, %v1450
    %v1456 = vmul.f32 1.0, %v1455
    %v1457 = vrcp.pop %v819
    %v1458 = vmul.f32 %v819, %v1457
    %v1459 = vsub.f32 1.0, %v1458
    %v1460 = vmul.f32 %v1457, %v1459
    %v1461 = vadd.f32 %v1457, %v1460
    %vm1462 = vweird.f32 %v819
    %vm1463 = vweird.f32 %v1457
    %vm1464 = vmor %vm1462, %vm1463
    %v1465 = vsel %vm1464, %v1457, %v1461
    %v1466 = vand.u32 2147483647, %v819
    %vm1467 = vcmp.eq.f32.partialorder %v1466, 8.507059e+37
    %v1468 = vand.u32 %v819, 2147483648
    %v1469 = vor.u32 1.1754944e-38, %v1468
    %v1470 = vsel %vm1467, %v1469, %v1465
    %v1471 = vmul.f32 1.0, %v1470
    %v1472 = vrcp.pop %v820
    %v1473 = vmul.f32 %v820, %v1472
    %v1474 = vsub.f32 1.0, %v1473
    %v1475 = vmul.f32 %v1472, %v1474
    %v1476 = vadd.f32 %v1472, %v1475
    %vm1477 = vweird.f32 %v820
    %vm1478 = vweird.f32 %v1472
    %vm1479 = vmor %vm1477, %vm1478
    %v1480 = vsel %vm1479, %v1472, %v1476
    %v1481 = vand.u32 2147483647, %v820
    %vm1482 = vcmp.eq.f32.partialorder %v1481, 8.507059e+37
    %v1483 = vand.u32 %v820, 2147483648
    %v1484 = vor.u32 1.1754944e-38, %v1483
    %v1485 = vsel %vm1482, %v1484, %v1480
    %v1486 = vmul.f32 1.0, %v1485
    %v1487 = vrcp.pop %v821
    %v1488 = vmul.f32 %v821, %v1487
    %v1489 = vsub.f32 1.0, %v1488
    %v1490 = vmul.f32 %v1487, %v1489
    %v1491 = vadd.f32 %v1487, %v1490
    %vm1492 = vweird.f32 %v821
    %vm1493 = vweird.f32 %v1487
    %vm1494 = vmor %vm1492, %vm1493
    %v1495 = vsel %vm1494, %v1487, %v1491
    %v1496 = vand.u32 2147483647, %v821
    %vm1497 = vcmp.eq.f32.partialorder %v1496, 8.507059e+37
    %v1498 = vand.u32 %v821, 2147483648
    %v1499 = vor.u32 1.1754944e-38, %v1498
    %v1500 = vsel %vm1497, %v1499, %v1495
    %v1501 = vmul.f32 1.0, %v1500
    %v1502 = vrcp.pop %v822
    %v1503 = vmul.f32 %v822, %v1502
    %v1504 = vsub.f32 1.0, %v1503
    %v1505 = vmul.f32 %v1502, %v1504
    %v1506 = vadd.f32 %v1502, %v1505
    %vm1507 = vweird.f32 %v822
    %vm1508 = vweird.f32 %v1502
    %vm1509 = vmor %vm1507, %vm1508
    %v1510 = vsel %vm1509, %v1502, %v1506
    %v1511 = vand.u32 2147483647, %v822
    %vm1512 = vcmp.eq.f32.partialorder %v1511, 8.507059e+37
    %v1513 = vand.u32 %v822, 2147483648
    %v1514 = vor.u32 1.1754944e-38, %v1513
    %v1515 = vsel %vm1512, %v1514, %v1510
    %v1516 = vmul.f32 1.0, %v1515
    %v1517 = vrcp.pop %v823
    %v1518 = vmul.f32 %v823, %v1517
    %v1519 = vsub.f32 1.0, %v1518
    %v1520 = vmul.f32 %v1517, %v1519
    %v1521 = vadd.f32 %v1517, %v1520
    %vm1522 = vweird.f32 %v823
    %vm1523 = vweird.f32 %v1517
    %vm1524 = vmor %vm1522, %vm1523
    %v1525 = vsel %vm1524, %v1517, %v1521
    %v1526 = vand.u32 2147483647, %v823
    %vm1527 = vcmp.eq.f32.partialorder %v1526, 8.507059e+37
    %v1528 = vand.u32 %v823, 2147483648
    %v1529 = vor.u32 1.1754944e-38, %v1528
    %v1530 = vsel %vm1527, %v1529, %v1525
    %v1531 = vmul.f32 1.0, %v1530
    %v1532 = vrcp.pop %v824
    %v1533 = vmul.f32 %v824, %v1532
    %v1534 = vsub.f32 1.0, %v1533
    %v1535 = vmul.f32 %v1532, %v1534
    %v1536 = vadd.f32 %v1532, %v1535
    %vm1537 = vweird.f32 %v824
    %vm1538 = vweird.f32 %v1532
    %vm1539 = vmor %vm1537, %vm1538
    %v1540 = vsel %vm1539, %v1532, %v1536
    %v1541 = vand.u32 2147483647, %v824
    %vm1542 = vcmp.eq.f32.partialorder %v1541, 8.507059e+37
    %v1543 = vand.u32 %v824, 2147483648
    %v1544 = vor.u32 1.1754944e-38, %v1543
    %v1545 = vsel %vm1542, %v1544, %v1540
    %v1546 = vmul.f32 1.0, %v1545
    %v1547 = vrcp.pop %v825
    %v1548 = vmul.f32 %v825, %v1547
    %v1549 = vsub.f32 1.0, %v1548
    %v1550 = vmul.f32 %v1547, %v1549
    %v1551 = vadd.f32 %v1547, %v1550
    %vm1552 = vweird.f32 %v825
    %vm1553 = vweird.f32 %v1547
    %vm1554 = vmor %vm1552, %vm1553
    %v1555 = vsel %vm1554, %v1547, %v1551
    %v1556 = vand.u32 2147483647, %v825
    %vm1557 = vcmp.eq.f32.partialorder %v1556, 8.507059e+37
    %v1558 = vand.u32 %v825, 2147483648
    %v1559 = vor.u32 1.1754944e-38, %v1558
    %v1560 = vsel %vm1557, %v1559, %v1555
    %v1561 = vmul.f32 1.0, %v1560
    %v1562 = vrcp.pop %v826
    %v1563 = vmul.f32 %v826, %v1562
    %v1564 = vsub.f32 1.0, %v1563
    %v1565 = vmul.f32 %v1562, %v1564
    %v1566 = vadd.f32 %v1562, %v1565
    %vm1567 = vweird.f32 %v826
    %vm1568 = vweird.f32 %v1562
    %vm1569 = vmor %vm1567, %vm1568
    %v1570 = vsel %vm1569, %v1562, %v1566
    %v1571 = vand.u32 2147483647, %v826
    %vm1572 = vcmp.eq.f32.partialorder %v1571, 8.507059e+37
    %v1573 = vand.u32 %v826, 2147483648
    %v1574 = vor.u32 1.1754944e-38, %v1573
    %v1575 = vsel %vm1572, %v1574, %v1570
    %v1576 = vmul.f32 1.0, %v1575
    %v1577 = vrcp.pop %v827
    %v1578 = vmul.f32 %v827, %v1577
    %v1579 = vsub.f32 1.0, %v1578
    %v1580 = vmul.f32 %v1577, %v1579
    %v1581 = vadd.f32 %v1577, %v1580
    %vm1582 = vweird.f32 %v827
    %vm1583 = vweird.f32 %v1577
    %vm1584 = vmor %vm1582, %vm1583
    %v1585 = vsel %vm1584, %v1577, %v1581
    %v1586 = vand.u32 2147483647, %v827
    %vm1587 = vcmp.eq.f32.partialorder %v1586, 8.507059e+37
    %v1588 = vand.u32 %v827, 2147483648
    %v1589 = vor.u32 1.1754944e-38, %v1588
    %v1590 = vsel %vm1587, %v1589, %v1585
    %v1591 = vmul.f32 1.0, %v1590
    %v1592 = vrcp.pop %v828
    %v1593 = vmul.f32 %v828, %v1592
    %v1594 = vsub.f32 1.0, %v1593
    %v1595 = vmul.f32 %v1592, %v1594
    %v1596 = vadd.f32 %v1592, %v1595
    %vm1597 = vweird.f32 %v828
    %vm1598 = vweird.f32 %v1592
    %vm1599 = vmor %vm1597, %vm1598
    %v1600 = vsel %vm1599, %v1592, %v1596
    %v1601 = vand.u32 2147483647, %v828
    %vm1602 = vcmp.eq.f32.partialorder %v1601, 8.507059e+37
    %v1603 = vand.u32 %v828, 2147483648
    %v1604 = vor.u32 1.1754944e-38, %v1603
    %v1605 = vsel %vm1602, %v1604, %v1600
    %v1606 = vmul.f32 1.0, %v1605
    %v1607 = vrcp.pop %v829
    %v1608 = vmul.f32 %v829, %v1607
    %v1609 = vsub.f32 1.0, %v1608
    %v1610 = vmul.f32 %v1607, %v1609
    %v1611 = vadd.f32 %v1607, %v1610
    %vm1612 = vweird.f32 %v829
    %vm1613 = vweird.f32 %v1607
    %vm1614 = vmor %vm1612, %vm1613
    %v1615 = vsel %vm1614, %v1607, %v1611
    %v1616 = vand.u32 2147483647, %v829
    %vm1617 = vcmp.eq.f32.partialorder %v1616, 8.507059e+37
    %v1618 = vand.u32 %v829, 2147483648
    %v1619 = vor.u32 1.1754944e-38, %v1618
    %v1620 = vsel %vm1617, %v1619, %v1615
    %v1621 = vmul.f32 1.0, %v1620
    %v1622 = vrcp.pop %v830
    %v1623 = vmul.f32 %v830, %v1622
    %v1624 = vsub.f32 1.0, %v1623
    %v1625 = vmul.f32 %v1622, %v1624
    %v1626 = vadd.f32 %v1622, %v1625
    %vm1627 = vweird.f32 %v830
    %vm1628 = vweird.f32 %v1622
    %vm1629 = vmor %vm1627, %vm1628
    %v1630 = vsel %vm1629, %v1622, %v1626
    %v1631 = vand.u32 2147483647, %v830
    %vm1632 = vcmp.eq.f32.partialorder %v1631, 8.507059e+37
    %v1633 = vand.u32 %v830, 2147483648
    %v1634 = vor.u32 1.1754944e-38, %v1633
    %v1635 = vsel %vm1632, %v1634, %v1630
    %v1636 = vmul.f32 1.0, %v1635
    %v1637 = vrcp.pop %v831
    %v1638 = vmul.f32 %v831, %v1637
    %v1639 = vsub.f32 1.0, %v1638
    %v1640 = vmul.f32 %v1637, %v1639
    %v1641 = vadd.f32 %v1637, %v1640
    %vm1642 = vweird.f32 %v831
    %vm1643 = vweird.f32 %v1637
    %vm1644 = vmor %vm1642, %vm1643
    %v1645 = vsel %vm1644, %v1637, %v1641
    %v1646 = vand.u32 2147483647, %v831
    %vm1647 = vcmp.eq.f32.partialorder %v1646, 8.507059e+37
    %v1648 = vand.u32 %v831, 2147483648
    %v1649 = vor.u32 1.1754944e-38, %v1648
    %v1650 = vsel %vm1647, %v1649, %v1645
    %v1651 = vmul.f32 1.0, %v1650
    %v1652 = vrcp.pop %v832
    %v1653 = vmul.f32 %v832, %v1652
    %v1654 = vsub.f32 1.0, %v1653
    %v1655 = vmul.f32 %v1652, %v1654
    %v1656 = vadd.f32 %v1652, %v1655
    %vm1657 = vweird.f32 %v832
    %vm1658 = vweird.f32 %v1652
    %vm1659 = vmor %vm1657, %vm1658
    %v1660 = vsel %vm1659, %v1652, %v1656
    %v1661 = vand.u32 2147483647, %v832
    %vm1662 = vcmp.eq.f32.partialorder %v1661, 8.507059e+37
    %v1663 = vand.u32 %v832, 2147483648
    %v1664 = vor.u32 1.1754944e-38, %v1663
    %v1665 = vsel %vm1662, %v1664, %v1660
    %v1666 = vmul.f32 1.0, %v1665
    %v1667 = vrcp.pop %v833
    %v1668 = vmul.f32 %v833, %v1667
    %v1669 = vsub.f32 1.0, %v1668
    %v1670 = vmul.f32 %v1667, %v1669
    %v1671 = vadd.f32 %v1667, %v1670
    %vm1672 = vweird.f32 %v833
    %vm1673 = vweird.f32 %v1667
    %vm1674 = vmor %vm1672, %vm1673
    %v1675 = vsel %vm1674, %v1667, %v1671
    %v1676 = vand.u32 2147483647, %v833
    %vm1677 = vcmp.eq.f32.partialorder %v1676, 8.507059e+37
    %v1678 = vand.u32 %v833, 2147483648
    %v1679 = vor.u32 1.1754944e-38, %v1678
    %v1680 = vsel %vm1677, %v1679, %v1675
    %v1681 = vmul.f32 1.0, %v1680
    %v1682 = vrcp.pop %v834
    %v1683 = vmul.f32 %v834, %v1682
    %v1684 = vsub.f32 1.0, %v1683
    %v1685 = vmul.f32 %v1682, %v1684
    %v1686 = vadd.f32 %v1682, %v1685
    %vm1687 = vweird.f32 %v834
    %vm1688 = vweird.f32 %v1682
    %vm1689 = vmor %vm1687, %vm1688
    %v1690 = vsel %vm1689, %v1682, %v1686
    %v1691 = vand.u32 2147483647, %v834
    %vm1692 = vcmp.eq.f32.partialorder %v1691, 8.507059e+37
    %v1693 = vand.u32 %v834, 2147483648
    %v1694 = vor.u32 1.1754944e-38, %v1693
    %v1695 = vsel %vm1692, %v1694, %v1690
    %v1696 = vmul.f32 1.0, %v1695
    %v1697 = vrcp.pop %v835
    %v1698 = vmul.f32 %v835, %v1697
    %v1699 = vsub.f32 1.0, %v1698
    %v1700 = vmul.f32 %v1697, %v1699
    %v1701 = vadd.f32 %v1697, %v1700
    %vm1702 = vweird.f32 %v835
    %vm1703 = vweird.f32 %v1697
    %vm1704 = vmor %vm1702, %vm1703
    %v1705 = vsel %vm1704, %v1697, %v1701
    %v1706 = vand.u32 2147483647, %v835
    %vm1707 = vcmp.eq.f32.partialorder %v1706, 8.507059e+37
    %v1708 = vand.u32 %v835, 2147483648
    %v1709 = vor.u32 1.1754944e-38, %v1708
    %v1710 = vsel %vm1707, %v1709, %v1705
    %v1711 = vmul.f32 1.0, %v1710
    %v1712 = vrcp.pop %v836
    %v1713 = vmul.f32 %v836, %v1712
    %v1714 = vsub.f32 1.0, %v1713
    %v1715 = vmul.f32 %v1712, %v1714
    %v1716 = vadd.f32 %v1712, %v1715
    %vm1717 = vweird.f32 %v836
    %vm1718 = vweird.f32 %v1712
    %vm1719 = vmor %vm1717, %vm1718
    %v1720 = vsel %vm1719, %v1712, %v1716
    %v1721 = vand.u32 2147483647, %v836
    %vm1722 = vcmp.eq.f32.partialorder %v1721, 8.507059e+37
    %v1723 = vand.u32 %v836, 2147483648
    %v1724 = vor.u32 1.1754944e-38, %v1723
    %v1725 = vsel %vm1722, %v1724, %v1720
    %v1726 = vmul.f32 1.0, %v1725
    %v1727 = vrcp.pop %v837
    %v1728 = vmul.f32 %v837, %v1727
    %v1729 = vsub.f32 1.0, %v1728
    %v1730 = vmul.f32 %v1727, %v1729
    %v1731 = vadd.f32 %v1727, %v1730
    %vm1732 = vweird.f32 %v837
    %vm1733 = vweird.f32 %v1727
    %vm1734 = vmor %vm1732, %vm1733
    %v1735 = vsel %vm1734, %v1727, %v1731
    %v1736 = vand.u32 2147483647, %v837
    %vm1737 = vcmp.eq.f32.partialorder %v1736, 8.507059e+37
    %v1738 = vand.u32 %v837, 2147483648
    %v1739 = vor.u32 1.1754944e-38, %v1738
    %v1740 = vsel %vm1737, %v1739, %v1735
    %v1741 = vmul.f32 1.0, %v1740
    %v1742 = vrcp.pop %v838
    %v1743 = vmul.f32 %v838, %v1742
    %v1744 = vsub.f32 1.0, %v1743
    %v1745 = vmul.f32 %v1742, %v1744
    %v1746 = vadd.f32 %v1742, %v1745
    %vm1747 = vweird.f32 %v838
    %vm1748 = vweird.f32 %v1742
    %vm1749 = vmor %vm1747, %vm1748
    %v1750 = vsel %vm1749, %v1742, %v1746
    %v1751 = vand.u32 2147483647, %v838
    %vm1752 = vcmp.eq.f32.partialorder %v1751, 8.507059e+37
    %v1753 = vand.u32 %v838, 2147483648
    %v1754 = vor.u32 1.1754944e-38, %v1753
    %v1755 = vsel %vm1752, %v1754, %v1750
    %v1756 = vmul.f32 1.0, %v1755
    %v1757 = vrcp.pop %v839
    %v1758 = vmul.f32 %v839, %v1757
    %v1759 = vsub.f32 1.0, %v1758
    %v1760 = vmul.f32 %v1757, %v1759
    %v1761 = vadd.f32 %v1757, %v1760
    %vm1762 = vweird.f32 %v839
    %vm1763 = vweird.f32 %v1757
    %vm1764 = vmor %vm1762, %vm1763
    %v1765 = vsel %vm1764, %v1757, %v1761
    %v1766 = vand.u32 2147483647, %v839
    %vm1767 = vcmp.eq.f32.partialorder %v1766, 8.507059e+37
    %v1768 = vand.u32 %v839, 2147483648
    %v1769 = vor.u32 1.1754944e-38, %v1768
    %v1770 = vsel %vm1767, %v1769, %v1765
    %v1771 = vmul.f32 1.0, %v1770
    %v1772 = vrcp.pop %v840
    %v1773 = vmul.f32 %v840, %v1772
    %v1774 = vsub.f32 1.0, %v1773
    %v1775 = vmul.f32 %v1772, %v1774
    %v1776 = vadd.f32 %v1772, %v1775
    %vm1777 = vweird.f32 %v840
    %vm1778 = vweird.f32 %v1772
    %vm1779 = vmor %vm1777, %vm1778
    %v1780 = vsel %vm1779, %v1772, %v1776
    %v1781 = vand.u32 2147483647, %v840
    %vm1782 = vcmp.eq.f32.partialorder %v1781, 8.507059e+37
    %v1783 = vand.u32 %v840, 2147483648
    %v1784 = vor.u32 1.1754944e-38, %v1783
    %v1785 = vsel %vm1782, %v1784, %v1780
    %v1786 = vmul.f32 1.0, %v1785
    %v1787 = vrcp.pop %v841
    %v1788 = vmul.f32 %v841, %v1787
    %v1789 = vsub.f32 1.0, %v1788
    %v1790 = vmul.f32 %v1787, %v1789
    %v1791 = vadd.f32 %v1787, %v1790
    %vm1792 = vweird.f32 %v841
    %vm1793 = vweird.f32 %v1787
    %vm1794 = vmor %vm1792, %vm1793
    %v1795 = vsel %vm1794, %v1787, %v1791
    %v1796 = vand.u32 2147483647, %v841
    %vm1797 = vcmp.eq.f32.partialorder %v1796, 8.507059e+37
    %v1798 = vand.u32 %v841, 2147483648
    %v1799 = vor.u32 1.1754944e-38, %v1798
    %v1800 = vsel %vm1797, %v1799, %v1795
    %v1801 = vmul.f32 1.0, %v1800
    %v1866 = vlaneseq
    %v1867 = vand.u32 %v1866, 127
    %v1868 = vperm.slane %v856, %v1867
    %v1869 = vadd.s32 %v1867, 4294967288
    %v1870 = vperm.slane %v871, %v1869
    %vm1871 = vcmask 130112
    %v1872 = vsel %vm1871, %v1870, %v1868
    %v1873 = vadd.s32 %v1867, 4294967280
    %v1874 = vperm.slane %v886, %v1873
    %vm1875 = vcmask 195712
    %v1876 = vsel %vm1875, %v1874, %v1872
    %v1877 = vadd.s32 %v1867, 4294967272
    %v1878 = vperm.slane %v901, %v1877
    %vm1879 = vcmask 261312
    %v1880 = vsel %vm1879, %v1878, %v1876
    %v1881 = vadd.s32 %v1867, 4294967264
    %v1882 = vperm.slane %v916, %v1881
    %vm1883 = vcmask 326912
    %v1884 = vsel %vm1883, %v1882, %v1880
    %v1885 = vadd.s32 %v1867, 4294967256
    %v1886 = vperm.slane %v931, %v1885
    %vm1887 = vcmask 392512
    %v1888 = vsel %vm1887, %v1886, %v1884
    %v1889 = vadd.s32 %v1867, 4294967248
    %v1890 = vperm.slane %v946, %v1889
    %vm1891 = vcmask 458112
    %v1892 = vsel %vm1891, %v1890, %v1888
    %v1893 = vadd.s32 %v1867, 4294967240
    %v1894 = vperm.slane %v961, %v1893
    %vm1895 = vcmask 523712
    %v1896 = vsel %vm1895, %v1894, %v1892
    %v1897 = vadd.s32 %v1867, 4294967232
    %v1898 = vperm.slane %v976, %v1897
    %vm1899 = vcmask 589312
    %v1900 = vsel %vm1899, %v1898, %v1896
    %v1901 = vadd.s32 %v1867, 4294967224
    %v1902 = vperm.slane %v991, %v1901
    %vm1903 = vcmask 654912
    %v1904 = vsel %vm1903, %v1902, %v1900
    %v1905 = vadd.s32 %v1867, 4294967216
    %v1906 = vperm.slane %v1006, %v1905
    %vm1907 = vcmask 720512
    %v1908 = vsel %vm1907, %v1906, %v1904
    %v1909 = vadd.s32 %v1867, 4294967208
    %v1910 = vperm.slane %v1021, %v1909
    %vm1911 = vcmask 786112
    %v1912 = vsel %vm1911, %v1910, %v1908
    %v1913 = vadd.s32 %v1867, 4294967200
    %v1914 = vperm.slane %v1036, %v1913
    %vm1915 = vcmask 851712
    %v1916 = vsel %vm1915, %v1914, %v1912
    %v1917 = vadd.s32 %v1867, 4294967192
    %v1918 = vperm.slane %v1051, %v1917
    %vm1919 = vcmask 917312
    %v1920 = vsel %vm1919, %v1918, %v1916
    %v1921 = vadd.s32 %v1867, 4294967184
    %v1922 = vperm.slane %v1066, %v1921
    %vm1923 = vcmask 982912
    %v1924 = vsel %vm1923, %v1922, %v1920
    %v1925 = vadd.s32 %v1867, 4294967176
    %v1926 = vperm.slane %v1081, %v1925
    %vm1927 = vcmask 1048512
    %v1928 = vsel %vm1927, %v1926, %v1924
    %v1929 = vperm.slane %v1096, %v1867
    %v1930 = vperm.slane %v1111, %v1869
    %v1931 = vsel %vm1871, %v1930, %v1929
    %v1932 = vperm.slane %v1126, %v1873
    %v1933 = vsel %vm1875, %v1932, %v1931
    %v1934 = vperm.slane %v1141, %v1877
    %v1935 = vsel %vm1879, %v1934, %v1933
    %v1936 = vperm.slane %v1156, %v1881
    %v1937 = vsel %vm1883, %v1936, %v1935
    %v1938 = vperm.slane %v1171, %v1885
    %v1939 = vsel %vm1887, %v1938, %v1937
    %v1940 = vperm.slane %v1186, %v1889
    %v1941 = vsel %vm1891, %v1940, %v1939
    %v1942 = vperm.slane %v1201, %v1893
    %v1943 = vsel %vm1895, %v1942, %v1941
    %v1944 = vperm.slane %v1216, %v1897
    %v1945 = vsel %vm1899, %v1944, %v1943
    %v1946 = vperm.slane %v1231, %v1901
    %v1947 = vsel %vm1903, %v1946, %v1945
    %v1948 = vperm.slane %v1246, %v1905
    %v1949 = vsel %vm1907, %v1948, %v1947
    %v1950 = vperm.slane %v1261, %v1909
    %v1951 = vsel %vm1911, %v1950, %v1949
    %v1952 = vperm.slane %v1276, %v1913
    %v1953 = vsel %vm1915, %v1952, %v1951
    %v1954 = vperm.slane %v1291, %v1917
    %v1955 = vsel %vm1919, %v1954, %v1953
    %v1956 = vperm.slane %v1306, %v1921
    %v1957 = vsel %vm1923, %v1956, %v1955
    %v1958 = vperm.slane %v1321, %v1925
    %v1959 = vsel %vm1927, %v1958, %v1957
    %v1960 = vperm.slane %v1336, %v1867
    %v1961 = vperm.slane %v1351, %v1869
    %v1962 = vsel %vm1871, %v1961, %v1960
    %v1963 = vperm.slane %v1366, %v1873
    %v1964 = vsel %vm1875, %v1963, %v1962
    %v1965 = vperm.slane %v1381, %v1877
    %v1966 = vsel %vm1879, %v1965, %v1964
    %v1967 = vperm.slane %v1396, %v1881
    %v1968 = vsel %vm1883, %v1967, %v1966
    %v1969 = vperm.slane %v1411, %v1885
    %v1970 = vsel %vm1887, %v1969, %v1968
    %v1971 = vperm.slane %v1426, %v1889
    %v1972 = vsel %vm1891, %v1971, %v1970
    %v1973 = vperm.slane %v1441, %v1893
    %v1974 = vsel %vm1895, %v1973, %v1972
    %v1975 = vperm.slane %v1456, %v1897
    %v1976 = vsel %vm1899, %v1975, %v1974
    %v1977 = vperm.slane %v1471, %v1901
    %v1978 = vsel %vm1903, %v1977, %v1976
    %v1979 = vperm.slane %v1486, %v1905
    %v1980 = vsel %vm1907, %v1979, %v1978
    %v1981 = vperm.slane %v1501, %v1909
    %v1982 = vsel %vm1911, %v1981, %v1980
    %v1983 = vperm.slane %v1516, %v1913
    %v1984 = vsel %vm1915, %v1983, %v1982
    %v1985 = vperm.slane %v1531, %v1917
    %v1986 = vsel %vm1919, %v1985, %v1984
    %v1987 = vperm.slane %v1546, %v1921
    %v1988 = vsel %vm1923, %v1987, %v1986
    %v1989 = vperm.slane %v1561, %v1925
    %v1990 = vsel %vm1927, %v1989, %v1988
    %v1991 = vperm.slane %v1576, %v1867
    %v1992 = vperm.slane %v1591, %v1869
    %v1993 = vsel %vm1871, %v1992, %v1991
    %v1994 = vperm.slane %v1606, %v1873
    %v1995 = vsel %vm1875, %v1994, %v1993
    %v1996 = vperm.slane %v1621, %v1877
    %v1997 = vsel %vm1879, %v1996, %v1995
    %v1998 = vperm.slane %v1636, %v1881
    %v1999 = vsel %vm1883, %v1998, %v1997
    %v2000 = vperm.slane %v1651, %v1885
    %v2001 = vsel %vm1887, %v2000, %v1999
    %v2002 = vperm.slane %v1666, %v1889
    %v2003 = vsel %vm1891, %v2002, %v2001
    %v2004 = vperm.slane %v1681, %v1893
    %v2005 = vsel %vm1895, %v2004, %v2003
    %v2006 = vperm.slane %v1696, %v1897
    %v2007 = vsel %vm1899, %v2006, %v2005
    %v2008 = vperm.slane %v1711, %v1901
    %v2009 = vsel %vm1903, %v2008, %v2007
    %v2010 = vperm.slane %v1726, %v1905
    %v2011 = vsel %vm1907, %v2010, %v2009
    %v2012 = vperm.slane %v1741, %v1909
    %v2013 = vsel %vm1911, %v2012, %v2011
    %v2014 = vperm.slane %v1756, %v1913
    %v2015 = vsel %vm1915, %v2014, %v2013
    %v2016 = vperm.slane %v1771, %v1917
    %v2017 = vsel %vm1919, %v2016, %v2015
    %v2018 = vperm.slane %v1786, %v1921
    %v2019 = vsel %vm1923, %v2018, %v2017
    %v2020 = vperm.slane %v1801, %v1925
    %v2021 = vsel %vm1927, %v2020, %v2019
    %vm2022 = vcmask 1041409
    %v2023 = vsel %vm2022, %v1959, %v1928
    %vm2024 = vcmask 1042434
    %v2025 = vsel %vm2024, %v1990, %v2023
    %vm2026 = vcmask 1043459
    %v2027 = vsel %vm2026, %v2021, %v2025
    %2029 = vst [vmem:[#allocation2] sm:$0xf] %v2027
    // Predicated region
    $region6: #{tpu_custom_call.1} parent=1 // pred_check
      _
    $region7: #{tpu_custom_call.1} parent=1 // pred_check_branch
      %2031 = sbr.rel (0) target = $region9
    $region8: #{tpu_custom_call.1} parent=1 // pred_region
      %2033 = vsyncadd [#allocation3], 0
      %s2035 = sshll.u32 [#allocation2], 4
      %s2036 = int_to_ptr.vmem [resolvable:$true] %s2035
      %s2037 = sshll.u32 %s1, 4
      %s2038 = int_to_ptr.hbm [resolvable:$true] %s2037
      %2040 = dma.vmem_to_hbm [thread:$0]  %s2036, 64, %s2038, [#allocation3]
    $region9: #{tpu_custom_call.1} parent=1 // pred_fallthru
      _
    // Predicated region
    $region10: #{tpu_custom_call.1} parent=1 // pred_check
      _
    $region11: #{tpu_custom_call.1} parent=1 // pred_check_branch
      %2042 = sbr.rel (0) target = $region13
    $region12: #{tpu_custom_call.1} parent=1 // pred_region
      %2044 = dma.done [#allocation3], 64
    $region13: #{tpu_custom_call.1} parent=1 // pred_fallthru
      _
    %2045 = vsyncpa [#allocation3], 1

</llo_original>
